<compile_context>
chip_gen: v5e
topology: v5e:2x2
jax: 0.10.0
libtpu: 0.0.40
codegen_flags: <defaults>
</compile_context>

<pallas_src>
import jax
import jax.numpy as jnp
import numpy as np
from jax import lax
from jax.experimental import pallas as pl
from jax.experimental.pallas import tpu as pltpu


def _round_up(v, m):
    return ((v + m - 1) // m) * m


def _pick_time_chunk(seq_len, max_ts=128):
    """Largest chunk size <= max_ts dividing seq_len (whole-sequence fallback)."""
    if seq_len <= max_ts:
        return seq_len
    best = 1
    for d in range(1, max_ts + 1):
        if seq_len % d == 0:
            best = d
    return best if best >= 8 else seq_len


def _sigmoid(v):
    return 1.0 / (1.0 + jnp.exp(-v))


def _lstm_kernel(x_ref, wx_ref, wh_ref, b_ref, h0_ref, c0_ref,
                 hseq_ref, clast_ref, hproj_sc, c_sc, xp_sc):
    # x_ref    : (TS, Bp, Ip)     wx_ref : (Ip, 4*Hp)    wh_ref : (Hp, 4*Hp)
    # b_ref    : (1, 4*Hp)        h0/c0  : (Bp, Hp)
    # hseq_ref : (TS, Bp, Hp)     clast  : (Bp, Hp)
    # hproj_sc : (Bp, 4*Hp)       c_sc   : (Bp, Hp)      xp_sc : (TS, Bp, 4*Hp)
    ts, bp, ip = x_ref.shape
    hd = c_sc.shape[-1]
    chunk = pl.program_id(0)

    # --- per-chunk input projection: one big MXU matmul, biases folded in ----
    xp = jnp.dot(x_ref[...].reshape(ts * bp, ip), wx_ref[...],
                 preferred_element_type=jnp.float32) + b_ref[...]
    xp_sc[...] = xp.reshape(ts, bp, 4 * hd)

    # --- initialize recurrent carries on the first chunk ----------------------
    @pl.when(chunk == 0)
    def _():
        hp0 = jnp.dot(h0_ref[...], wh_ref[...],
                      preferred_element_type=jnp.float32)        # (Bp, 4*Hp)
        hproj_sc[...] = hp0
        # Reference quirk at t=0: candidate-gate recurrent term is c_h[0]
        # (batch row 0 of lin_c_h(h0)) broadcast over the batch.
        hproj_sc[:, pl.ds(3 * hd, hd)] = jnp.broadcast_to(
            hp0[0:1, 3 * hd:], (bp, hd))
        c_sc[...] = c0_ref[...]

    wh = wh_ref[...]

    def step(t, carry):
        hproj, c_prev = carry
        gates = xp_sc[t] + hproj                                  # (Bp, 4*Hp)
        f = _sigmoid(gates[:, 0 * hd:1 * hd])
        i = _sigmoid(gates[:, 1 * hd:2 * hd])
        o = _sigmoid(gates[:, 2 * hd:3 * hd])
        g = jnp.tanh(gates[:, 3 * hd:])
        c_new = f * c_prev + i * g
        h_new = o * jnp.tanh(c_new)
        hseq_ref[t] = h_new
        hproj_new = jnp.dot(h_new, wh, preferred_element_type=jnp.float32)
        return (hproj_new, c_new)

    carry = lax.fori_loop(0, ts, step, (hproj_sc[...], c_sc[...]),
                          unroll=min(ts, 8))
    hproj_sc[...] = carry[0]
    c_sc[...] = carry[1]
    clast_ref[...] = carry[1]   # last chunk's write is c at step S-1


def lstm_forward(x, wx_gates, bx_gates, wh_gates, bh_gates, h0=None, c0=None,
                 *, max_time_chunk=128):
    """Pallas port of LSTM.forward.

    x:  (S, B, I) float.  Gate order everywhere is [f, i, o, c].
    wx_gates[g]: (H, I), bx_gates[g]: (H,), wh_gates[g]: (H, H), bh_gates[g]: (H,)
    h0, c0: optional (L, B, H); default zeros like the reference.
    Returns (h_seq (S,B,H), (h_last (B,H), c_last (B,H))).
    """
    x = jnp.asarray(x, jnp.float32)
    S, B, I = x.shape
    H = wh_gates[0].shape[0]

    if h0 is None:
        h0 = jnp.zeros((1, B, H), jnp.float32)
    if c0 is None:
        c0 = jnp.zeros((1, B, H), jnp.float32)

    Bp = _round_up(B, 8)
    Hp = _round_up(H, 128)
    Ip = _round_up(I, 128)
    TS = _pick_time_chunk(S, max_time_chunk)
    n_chunks = S // TS

    # ---- pack + zero-pad parameters: gates [f, i, o, c] along the lane axis --
    wx_cat = jnp.zeros((Ip, 4 * Hp), jnp.float32)
    wh_cat = jnp.zeros((Hp, 4 * Hp), jnp.float32)
    b_cat = jnp.zeros((1, 4 * Hp), jnp.float32)
    for g in range(4):
        lo = g * Hp
        wx_cat = wx_cat.at[:I, lo:lo + H].set(jnp.asarray(wx_gates[g], jnp.float32).T)
        wh_cat = wh_cat.at[:H, lo:lo + H].set(jnp.asarray(wh_gates[g], jnp.float32).T)
        b_cat = b_cat.at[0, lo:lo + H].set(
            jnp.asarray(bx_gates[g], jnp.float32) + jnp.asarray(bh_gates[g], jnp.float32))

    x_p = jnp.pad(x, ((0, 0), (0, Bp - B), (0, Ip - I)))
    h0_p = jnp.pad(jnp.asarray(h0, jnp.float32).sum(0), ((0, Bp - B), (0, Hp - H)))
    c0_p = jnp.pad(jnp.asarray(c0, jnp.float32).sum(0), ((0, Bp - B), (0, Hp - H)))

    # ---- VMEM budget (v7x has 64 MiB / TensorCore; leave headroom) -----------
    fb = 4
    est = fb * (2 * (TS * Bp * Ip + TS * Bp * Hp)                       # streamed tiles (x2 buffers)
                + 2 * (Ip * 4 * Hp + Hp * 4 * Hp + 4 * Hp + 3 * Bp * Hp)  # resident operands
                + (Bp * 4 * Hp + Bp * Hp + TS * Bp * 4 * Hp))             # scratch
    vmem_limit = int(min(max(2 * est, 16 * 2 ** 20), 64 * 2 ** 20))

    grid_spec = pltpu.PrefetchScalarGridSpec(
        num_scalar_prefetch=0,
        grid=(n_chunks,),
        in_specs=[
            pl.BlockSpec((TS, Bp, Ip), lambda t: (t, 0, 0)),   # x: streamed over time
            pl.BlockSpec((Ip, 4 * Hp), lambda t: (0, 0)),      # Wx_cat: resident
            pl.BlockSpec((Hp, 4 * Hp), lambda t: (0, 0)),      # Wh_cat: resident
            pl.BlockSpec((1, 4 * Hp), lambda t: (0, 0)),       # folded biases (bx+bh)
            pl.BlockSpec((Bp, Hp), lambda t: (0, 0)),          # h0 (summed over layers)
            pl.BlockSpec((Bp, Hp), lambda t: (0, 0)),          # c0 (summed over layers)
        ],
        out_specs=(
            pl.BlockSpec((TS, Bp, Hp), lambda t: (t, 0, 0)),   # h_seq: streamed out
            pl.BlockSpec((Bp, Hp), lambda t: (0, 0)),          # final cell state
        ),
        scratch_shapes=[
            pltpu.VMEM((Bp, 4 * Hp), jnp.float32),             # h-projection carry
            pltpu.VMEM((Bp, Hp), jnp.float32),                 # cell-state carry
            pltpu.VMEM((TS, Bp, 4 * Hp), jnp.float32),         # per-chunk gate inputs
        ],
    )

    h_seq_p, c_last_p = pl.pallas_call(
        _lstm_kernel,
        grid_spec=grid_spec,
        out_shape=(
            jax.ShapeDtypeStruct((S, Bp, Hp), jnp.float32),
            jax.ShapeDtypeStruct((Bp, Hp), jnp.float32),
        ),
        compiler_params=pltpu.CompilerParams(
            dimension_semantics=("arbitrary",),   # time recurrence is serial
            vmem_limit_bytes=vmem_limit,
        ),
    )(x_p, wx_cat, wh_cat, b_cat, h0_p, c0_p)

    h_seq = h_seq_p[:, :B, :H]
    h_last = h_seq[-1]
    c_last = c_last_p[:B, :H]
    return h_seq, (h_last, c_last)


def lstm_reference(x, wx_gates, bx_gates, wh_gates, bh_gates, h0=None, c0=None):
    """Pure-JAX mirror of the PyTorch forward (including the c_h[0] quirk)."""
    sigm, tanh = jax.nn.sigmoid, jnp.tanh
    S, B, _ = x.shape
    H = wh_gates[0].shape[0]
    if h0 is None:
        h0 = jnp.zeros((1, B, H), jnp.float32)
    if c0 is None:
        c0 = jnp.zeros((1, B, H), jnp.float32)
    h = h0.sum(0)
    c = c0.sum(0)
    lin = lambda v, w, b: v @ w.T + b
    (wfx, wix, wox, wcx) = wx_gates
    (bfx, bix, box_, bcx) = bx_gates
    (wfh, wih, woh, wch) = wh_gates
    (bfh, bih, boh, bch) = bh_gates
    f_x = lin(x, wfx, bfx); i_x = lin(x, wix, bix)
    o_x = lin(x, wox, box_); c_x = lin(x, wcx, bcx)
    f_h = lin(h, wfh, bfh); i_h = lin(h, wih, bih)
    o_h = lin(h, woh, boh); c_h = lin(h, wch, bch)
    f = sigm(f_x[0] + f_h); i = sigm(i_x[0] + i_h); o = sigm(o_x[0] + o_h)
    c_seq = [f * c + i * tanh(c_x[0] + c_h[0])]
    h_seq = [o * tanh(c_seq[-1])]
    for t in range(1, S):
        hp = h_seq[-1]
        f_t = sigm(f_x[t] + lin(hp, wfh, bfh))
        i_t = sigm(i_x[t] + lin(hp, wih, bih))
        o_t = sigm(o_x[t] + lin(hp, woh, boh))
        c_seq.append(f_t * c_seq[-1] + i_t * tanh(c_x[t] + lin(hp, wch, bch)))
        h_seq.append(o_t * tanh(c_seq[-1]))
    return jnp.stack(h_seq), (h_seq[-1], c_seq[-1])


if __name__ == "__main__":
    seq_len, batch, input_size, hidden_size = 8, 2, 4, 32

    key = jax.random.PRNGKey(0)
    keys = jax.random.split(key, 19)
    kx, kh0, kc0 = keys[0], keys[1], keys[2]
    k_iter = iter(keys[3:])

    # PyTorch nn.Linear-style init: U(-1/sqrt(fan_in), 1/sqrt(fan_in))
    bx_bound = 1.0 / np.sqrt(input_size)
    bh_bound = 1.0 / np.sqrt(hidden_size)
    wx_gates, bx_gates, wh_gates, bh_gates = [], [], [], []
    for _ in range(4):   # gate order [f, i, o, c]
        wx_gates.append(jax.random.uniform(next(k_iter), (hidden_size, input_size),
                                           jnp.float32, -bx_bound, bx_bound))
        bx_gates.append(jax.random.uniform(next(k_iter), (hidden_size,),
                                           jnp.float32, -bx_bound, bx_bound))
        wh_gates.append(jax.random.uniform(next(k_iter), (hidden_size, hidden_size),
                                           jnp.float32, -bh_bound, bh_bound))
        bh_gates.append(jax.random.uniform(next(k_iter), (hidden_size,),
                                           jnp.float32, -bh_bound, bh_bound))

    x = jax.random.normal(kx, (seq_len, batch, input_size), jnp.float32)
    h0 = jax.random.normal(kh0, (1, batch, hidden_size), jnp.float32)
    c0 = jax.random.normal(kc0, (1, batch, hidden_size), jnp.float32)

    # explicit initial states (exercises the t=0 c_h[0] quirk)
    h_seq, (h_last, c_last) = lstm_forward(x, wx_gates, bx_gates, wh_gates, bh_gates, h0, c0)
    jax.block_until_ready((h_seq, h_last, c_last))
    r_seq, (r_h, r_c) = lstm_reference(x, wx_gates, bx_gates, wh_gates, bh_gates, h0, c0)
    np.testing.assert_allclose(np.asarray(h_seq), np.asarray(r_seq), rtol=3e-5, atol=3e-5)
    np.testing.assert_allclose(np.asarray(h_last), np.asarray(r_h), rtol=3e-5, atol=3e-5)
    np.testing.assert_allclose(np.asarray(c_last), np.asarray(r_c), rtol=3e-5, atol=3e-5)

    # default (None) initial states, like the module's default path
    h_seq2, (h_last2, c_last2) = lstm_forward(x, wx_gates, bx_gates, wh_gates, bh_gates)
    jax.block_until_ready((h_seq2, h_last2, c_last2))
    r_seq2, (r_h2, r_c2) = lstm_reference(x, wx_gates, bx_gates, wh_gates, bh_gates)
    np.testing.assert_allclose(np.asarray(h_seq2), np.asarray(r_seq2), rtol=3e-5, atol=3e-5)
    np.testing.assert_allclose(np.asarray(c_last2), np.asarray(r_c2), rtol=3e-5, atol=3e-5)

    print("KERNEL_OK")
</pallas_src>

<mosaic_0001>
module attributes {stable_mosaic.version = 11 : i64} {
  func.func @_lstm_kernel(%arg0: i32, %arg1: memref<8x8x128xf32, #tpu.memory_space<vmem>>, %arg2: memref<128x512xf32, #tpu.memory_space<vmem>>, %arg3: memref<128x512xf32, #tpu.memory_space<vmem>>, %arg4: memref<1x512xf32, #tpu.memory_space<vmem>>, %arg5: memref<8x128xf32, #tpu.memory_space<vmem>>, %arg6: memref<8x128xf32, #tpu.memory_space<vmem>>, %arg7: memref<8x8x128xf32, #tpu.memory_space<vmem>>, %arg8: memref<8x128xf32, #tpu.memory_space<vmem>>, %arg9: memref<8x512xf32, #tpu.memory_space<vmem>>, %arg10: memref<8x128xf32, #tpu.memory_space<vmem>>, %arg11: memref<8x8x512xf32, #tpu.memory_space<vmem>>) attributes {dimension_semantics = [#tpu.dimension_semantics<arbitrary>], iteration_bounds = array<i64: 1>, scalar_prefetch = 0 : i64, scratch_operands = 3 : i64, tpu.core_type = #tpu.core_type<tc>, window_params = [{transform_indices = @transform_0, window_bounds = array<i64: 8, 8, 128>}, {pipeline_mode = #tpu.pipeline_mode<synchronous>, transform_indices = @transform_1, window_bounds = array<i64: 128, 512>}, {pipeline_mode = #tpu.pipeline_mode<synchronous>, transform_indices = @transform_2, window_bounds = array<i64: 128, 512>}, {pipeline_mode = #tpu.pipeline_mode<synchronous>, transform_indices = @transform_3, window_bounds = array<i64: 1, 512>}, {pipeline_mode = #tpu.pipeline_mode<synchronous>, transform_indices = @transform_4, window_bounds = array<i64: 8, 128>}, {pipeline_mode = #tpu.pipeline_mode<synchronous>, transform_indices = @transform_5, window_bounds = array<i64: 8, 128>}, {transform_indices = @transform_6, window_bounds = array<i64: 8, 8, 128>}, {pipeline_mode = #tpu.pipeline_mode<synchronous>, transform_indices = @transform_7, window_bounds = array<i64: 8, 128>}]} {
    %c0 = arith.constant 0 : index
    %c0_0 = arith.constant 0 : index
    %c0_1 = arith.constant 0 : index
    %0 = vector.load %arg1[%c0, %c0_0, %c0_1] : memref<8x8x128xf32, #tpu.memory_space<vmem>>, vector<8x8x128xf32>
    %1 = vector.shape_cast %0 : vector<8x8x128xf32> to vector<64x128xf32>
    %c0_2 = arith.constant 0 : index
    %c0_3 = arith.constant 0 : index
    %2 = vector.load %arg2[%c0_2, %c0_3] : memref<128x512xf32, #tpu.memory_space<vmem>>, vector<128x512xf32>
    %cst = arith.constant dense<0.000000e+00> : vector<64x512xf32>
    %3 = tpu.matmul %1, %2, %cst {dimension_numbers = #tpu.dot_dimension_numbers<[1], [0], [0], [1], [0, 0, 1, 1], [], []>} : vector<64x128xf32>, vector<128x512xf32>, vector<64x512xf32> -> vector<64x512xf32>
    %c0_4 = arith.constant 0 : index
    %c0_5 = arith.constant 0 : index
    %4 = vector.load %arg4[%c0_4, %c0_5] : memref<1x512xf32, #tpu.memory_space<vmem>>, vector<1x512xf32>
    %5 = vector.broadcast %4 : vector<1x512xf32> to vector<64x512xf32>
    %6 = arith.addf %3, %5 : vector<64x512xf32>
    %7 = vector.shape_cast %6 : vector<64x512xf32> to vector<8x8x512xf32>
    %c0_6 = arith.constant 0 : index
    %c0_7 = arith.constant 0 : index
    %c0_8 = arith.constant 0 : index
    %8 = vector.load %arg11[%c0_6, %c0_7, %c0_8] : memref<8x8x512xf32, #tpu.memory_space<vmem>>, vector<8x8x512xf32>
    tpu.vector_store %arg11[%c0_6, %c0_7, %c0_8], %7 {strides = array<i32>} : memref<8x8x512xf32, #tpu.memory_space<vmem>>, vector<8x8x512xf32>,
    %c0_i32 = arith.constant 0 : i32
    %9 = arith.cmpi eq, %arg0, %c0_i32 : i32
    %10 = arith.extui %9 : i1 to i32
    %c0_i32_9 = arith.constant 0 : i32
    %11 = arith.cmpi ne, %10, %c0_i32_9 : i32
    scf.if %11 {
      %c0_135 = arith.constant 0 : index
      %c0_136 = arith.constant 0 : index
      %338 = vector.load %arg5[%c0_135, %c0_136] : memref<8x128xf32, #tpu.memory_space<vmem>>, vector<8x128xf32>
      %c0_137 = arith.constant 0 : index
      %c0_138 = arith.constant 0 : index
      %339 = vector.load %arg3[%c0_137, %c0_138] : memref<128x512xf32, #tpu.memory_space<vmem>>, vector<128x512xf32>
      %cst_139 = arith.constant dense<0.000000e+00> : vector<8x512xf32>
      %340 = tpu.matmul %338, %339, %cst_139 {dimension_numbers = #tpu.dot_dimension_numbers<[1], [0], [0], [1], [0, 0, 1, 1], [], []>} : vector<8x128xf32>, vector<128x512xf32>, vector<8x512xf32> -> vector<8x512xf32>
      %c0_140 = arith.constant 0 : index
      %c0_141 = arith.constant 0 : index
      %341 = vector.load %arg9[%c0_140, %c0_141] : memref<8x512xf32, #tpu.memory_space<vmem>>, vector<8x512xf32>
      tpu.vector_store %arg9[%c0_140, %c0_141], %340 {strides = array<i32>} : memref<8x512xf32, #tpu.memory_space<vmem>>, vector<8x512xf32>,
      %342 = vector.extract_strided_slice %340 {offsets = [0, 384], sizes = [1, 128], strides = [1, 1]} : vector<8x512xf32> to vector<1x128xf32>
      %343 = vector.shape_cast %342 : vector<1x128xf32> to vector<1x128xf32>
      %344 = vector.broadcast %343 : vector<1x128xf32> to vector<8x128xf32>
      %c0_142 = arith.constant 0 : index
      %c384 = arith.constant 384 : index
      %345 = vector.load %arg9[%c0_142, %c384] : memref<8x512xf32, #tpu.memory_space<vmem>>, vector<8x128xf32>
      tpu.vector_store %arg9[%c0_142, %c384], %344 {strides = array<i32>} : memref<8x512xf32, #tpu.memory_space<vmem>>, vector<8x128xf32>,
      %c0_143 = arith.constant 0 : index
      %c0_144 = arith.constant 0 : index
      %346 = vector.load %arg6[%c0_143, %c0_144] : memref<8x128xf32, #tpu.memory_space<vmem>>, vector<8x128xf32>
      %c0_145 = arith.constant 0 : index
      %c0_146 = arith.constant 0 : index
      %347 = vector.load %arg10[%c0_145, %c0_146] : memref<8x128xf32, #tpu.memory_space<vmem>>, vector<8x128xf32>
      tpu.vector_store %arg10[%c0_145, %c0_146], %346 {strides = array<i32>} : memref<8x128xf32, #tpu.memory_space<vmem>>, vector<8x128xf32>,
    } else {
    }
    %c0_10 = arith.constant 0 : index
    %c0_11 = arith.constant 0 : index
    %12 = vector.load %arg3[%c0_10, %c0_11] : memref<128x512xf32, #tpu.memory_space<vmem>>, vector<128x512xf32>
    %c0_12 = arith.constant 0 : index
    %c0_13 = arith.constant 0 : index
    %13 = vector.load %arg9[%c0_12, %c0_13] : memref<8x512xf32, #tpu.memory_space<vmem>>, vector<8x512xf32>
    %c0_14 = arith.constant 0 : index
    %c0_15 = arith.constant 0 : index
    %14 = vector.load %arg10[%c0_14, %c0_15] : memref<8x128xf32, #tpu.memory_space<vmem>>, vector<8x128xf32>
    %c0_i32_16 = arith.constant 0 : i32
    %15 = arith.index_cast %c0_i32_16 : i32 to index
    %c0_17 = arith.constant 0 : index
    %c0_18 = arith.constant 0 : index
    %16 = vector.load %arg11[%15, %c0_17, %c0_18] : memref<8x8x512xf32, #tpu.memory_space<vmem>>, vector<1x8x512xf32>
    %17 = vector.shape_cast %16 : vector<1x8x512xf32> to vector<8x512xf32>
    %18 = arith.addf %17, %13 : vector<8x512xf32>
    %19 = vector.extract_strided_slice %18 {offsets = [0, 0], sizes = [8, 128], strides = [1, 1]} : vector<8x512xf32> to vector<8x128xf32>
    %cst_19 = arith.constant 0.000000e+00 : f32
    %20 = vector.broadcast %cst_19 : f32 to vector<8x128xf32>
    %21 = arith.subf %20, %19 : vector<8x128xf32>
    %22 = math.exp %21 : vector<8x128xf32>
    %cst_20 = arith.constant 1.000000e+00 : f32
    %23 = vector.broadcast %cst_20 : f32 to vector<8x128xf32>
    %24 = arith.addf %23, %22 : vector<8x128xf32>
    %cst_21 = arith.constant 1.000000e+00 : f32
    %25 = vector.broadcast %cst_21 : f32 to vector<8x128xf32>
    %26 = arith.divf %25, %24 : vector<8x128xf32>
    %27 = vector.extract_strided_slice %18 {offsets = [0, 128], sizes = [8, 128], strides = [1, 1]} : vector<8x512xf32> to vector<8x128xf32>
    %cst_22 = arith.constant 0.000000e+00 : f32
    %28 = vector.broadcast %cst_22 : f32 to vector<8x128xf32>
    %29 = arith.subf %28, %27 : vector<8x128xf32>
    %30 = math.exp %29 : vector<8x128xf32>
    %cst_23 = arith.constant 1.000000e+00 : f32
    %31 = vector.broadcast %cst_23 : f32 to vector<8x128xf32>
    %32 = arith.addf %31, %30 : vector<8x128xf32>
    %cst_24 = arith.constant 1.000000e+00 : f32
    %33 = vector.broadcast %cst_24 : f32 to vector<8x128xf32>
    %34 = arith.divf %33, %32 : vector<8x128xf32>
    %35 = vector.extract_strided_slice %18 {offsets = [0, 256], sizes = [8, 128], strides = [1, 1]} : vector<8x512xf32> to vector<8x128xf32>
    %cst_25 = arith.constant 0.000000e+00 : f32
    %36 = vector.broadcast %cst_25 : f32 to vector<8x128xf32>
    %37 = arith.subf %36, %35 : vector<8x128xf32>
    %38 = math.exp %37 : vector<8x128xf32>
    %cst_26 = arith.constant 1.000000e+00 : f32
    %39 = vector.broadcast %cst_26 : f32 to vector<8x128xf32>
    %40 = arith.addf %39, %38 : vector<8x128xf32>
    %cst_27 = arith.constant 1.000000e+00 : f32
    %41 = vector.broadcast %cst_27 : f32 to vector<8x128xf32>
    %42 = arith.divf %41, %40 : vector<8x128xf32>
    %43 = vector.extract_strided_slice %18 {offsets = [0, 384], sizes = [8, 128], strides = [1, 1]} : vector<8x512xf32> to vector<8x128xf32>
    %44 = math.tanh %43 : vector<8x128xf32>
    %45 = arith.mulf %26, %14 : vector<8x128xf32>
    %46 = arith.mulf %34, %44 : vector<8x128xf32>
    %47 = arith.addf %45, %46 : vector<8x128xf32>
    %48 = math.tanh %47 : vector<8x128xf32>
    %49 = arith.mulf %42, %48 : vector<8x128xf32>
    %50 = arith.index_cast %c0_i32_16 : i32 to index
    %c0_28 = arith.constant 0 : index
    %c0_29 = arith.constant 0 : index
    %51 = vector.load %arg7[%50, %c0_28, %c0_29] : memref<8x8x128xf32, #tpu.memory_space<vmem>>, vector<1x8x128xf32>
    %52 = vector.shape_cast %51 : vector<1x8x128xf32> to vector<8x128xf32>
    %53 = vector.shape_cast %49 : vector<8x128xf32> to vector<1x8x128xf32>
    tpu.vector_store %arg7[%50, %c0_28, %c0_29], %53 {strides = array<i32>} : memref<8x8x128xf32, #tpu.memory_space<vmem>>, vector<1x8x128xf32>,
    %cst_30 = arith.constant dense<0.000000e+00> : vector<8x512xf32>
    %54 = tpu.matmul %49, %12, %cst_30 {dimension_numbers = #tpu.dot_dimension_numbers<[1], [0], [0], [1], [0, 0, 1, 1], [], []>} : vector<8x128xf32>, vector<128x512xf32>, vector<8x512xf32> -> vector<8x512xf32>
    %c1_i32 = arith.constant 1 : i32
    %55 = arith.index_cast %c1_i32 : i32 to index
    %c0_31 = arith.constant 0 : index
    %c0_32 = arith.constant 0 : index
    %56 = vector.load %arg11[%55, %c0_31, %c0_32] : memref<8x8x512xf32, #tpu.memory_space<vmem>>, vector<1x8x512xf32>
    %57 = vector.shape_cast %56 : vector<1x8x512xf32> to vector<8x512xf32>
    %58 = arith.addf %57, %54 : vector<8x512xf32>
    %59 = vector.extract_strided_slice %58 {offsets = [0, 0], sizes = [8, 128], strides = [1, 1]} : vector<8x512xf32> to vector<8x128xf32>
    %cst_33 = arith.constant 0.000000e+00 : f32
    %60 = vector.broadcast %cst_33 : f32 to vector<8x128xf32>
    %61 = arith.subf %60, %59 : vector<8x128xf32>
    %62 = math.exp %61 : vector<8x128xf32>
    %cst_34 = arith.constant 1.000000e+00 : f32
    %63 = vector.broadcast %cst_34 : f32 to vector<8x128xf32>
    %64 = arith.addf %63, %62 : vector<8x128xf32>
    %cst_35 = arith.constant 1.000000e+00 : f32
    %65 = vector.broadcast %cst_35 : f32 to vector<8x128xf32>
    %66 = arith.divf %65, %64 : vector<8x128xf32>
    %67 = vector.extract_strided_slice %58 {offsets = [0, 128], sizes = [8, 128], strides = [1, 1]} : vector<8x512xf32> to vector<8x128xf32>
    %cst_36 = arith.constant 0.000000e+00 : f32
    %68 = vector.broadcast %cst_36 : f32 to vector<8x128xf32>
    %69 = arith.subf %68, %67 : vector<8x128xf32>
    %70 = math.exp %69 : vector<8x128xf32>
    %cst_37 = arith.constant 1.000000e+00 : f32
    %71 = vector.broadcast %cst_37 : f32 to vector<8x128xf32>
    %72 = arith.addf %71, %70 : vector<8x128xf32>
    %cst_38 = arith.constant 1.000000e+00 : f32
    %73 = vector.broadcast %cst_38 : f32 to vector<8x128xf32>
    %74 = arith.divf %73, %72 : vector<8x128xf32>
    %75 = vector.extract_strided_slice %58 {offsets = [0, 256], sizes = [8, 128], strides = [1, 1]} : vector<8x512xf32> to vector<8x128xf32>
    %cst_39 = arith.constant 0.000000e+00 : f32
    %76 = vector.broadcast %cst_39 : f32 to vector<8x128xf32>
    %77 = arith.subf %76, %75 : vector<8x128xf32>
    %78 = math.exp %77 : vector<8x128xf32>
    %cst_40 = arith.constant 1.000000e+00 : f32
    %79 = vector.broadcast %cst_40 : f32 to vector<8x128xf32>
    %80 = arith.addf %79, %78 : vector<8x128xf32>
    %cst_41 = arith.constant 1.000000e+00 : f32
    %81 = vector.broadcast %cst_41 : f32 to vector<8x128xf32>
    %82 = arith.divf %81, %80 : vector<8x128xf32>
    %83 = vector.extract_strided_slice %58 {offsets = [0, 384], sizes = [8, 128], strides = [1, 1]} : vector<8x512xf32> to vector<8x128xf32>
    %84 = math.tanh %83 : vector<8x128xf32>
    %85 = arith.mulf %66, %47 : vector<8x128xf32>
    %86 = arith.mulf %74, %84 : vector<8x128xf32>
    %87 = arith.addf %85, %86 : vector<8x128xf32>
    %88 = math.tanh %87 : vector<8x128xf32>
    %89 = arith.mulf %82, %88 : vector<8x128xf32>
    %90 = arith.index_cast %c1_i32 : i32 to index
    %c0_42 = arith.constant 0 : index
    %c0_43 = arith.constant 0 : index
    %91 = vector.load %arg7[%90, %c0_42, %c0_43] : memref<8x8x128xf32, #tpu.memory_space<vmem>>, vector<1x8x128xf32>
    %92 = vector.shape_cast %91 : vector<1x8x128xf32> to vector<8x128xf32>
    %93 = vector.shape_cast %89 : vector<8x128xf32> to vector<1x8x128xf32>
    tpu.vector_store %arg7[%90, %c0_42, %c0_43], %93 {strides = array<i32>} : memref<8x8x128xf32, #tpu.memory_space<vmem>>, vector<1x8x128xf32>,
    %cst_44 = arith.constant dense<0.000000e+00> : vector<8x512xf32>
    %94 = tpu.matmul %89, %12, %cst_44 {dimension_numbers = #tpu.dot_dimension_numbers<[1], [0], [0], [1], [0, 0, 1, 1], [], []>} : vector<8x128xf32>, vector<128x512xf32>, vector<8x512xf32> -> vector<8x512xf32>
    %c2_i32 = arith.constant 2 : i32
    %95 = arith.index_cast %c2_i32 : i32 to index
    %c0_45 = arith.constant 0 : index
    %c0_46 = arith.constant 0 : index
    %96 = vector.load %arg11[%95, %c0_45, %c0_46] : memref<8x8x512xf32, #tpu.memory_space<vmem>>, vector<1x8x512xf32>
    %97 = vector.shape_cast %96 : vector<1x8x512xf32> to vector<8x512xf32>
    %98 = arith.addf %97, %94 : vector<8x512xf32>
    %99 = vector.extract_strided_slice %98 {offsets = [0, 0], sizes = [8, 128], strides = [1, 1]} : vector<8x512xf32> to vector<8x128xf32>
    %cst_47 = arith.constant 0.000000e+00 : f32
    %100 = vector.broadcast %cst_47 : f32 to vector<8x128xf32>
    %101 = arith.subf %100, %99 : vector<8x128xf32>
    %102 = math.exp %101 : vector<8x128xf32>
    %cst_48 = arith.constant 1.000000e+00 : f32
    %103 = vector.broadcast %cst_48 : f32 to vector<8x128xf32>
    %104 = arith.addf %103, %102 : vector<8x128xf32>
    %cst_49 = arith.constant 1.000000e+00 : f32
    %105 = vector.broadcast %cst_49 : f32 to vector<8x128xf32>
    %106 = arith.divf %105, %104 : vector<8x128xf32>
    %107 = vector.extract_strided_slice %98 {offsets = [0, 128], sizes = [8, 128], strides = [1, 1]} : vector<8x512xf32> to vector<8x128xf32>
    %cst_50 = arith.constant 0.000000e+00 : f32
    %108 = vector.broadcast %cst_50 : f32 to vector<8x128xf32>
    %109 = arith.subf %108, %107 : vector<8x128xf32>
    %110 = math.exp %109 : vector<8x128xf32>
    %cst_51 = arith.constant 1.000000e+00 : f32
    %111 = vector.broadcast %cst_51 : f32 to vector<8x128xf32>
    %112 = arith.addf %111, %110 : vector<8x128xf32>
    %cst_52 = arith.constant 1.000000e+00 : f32
    %113 = vector.broadcast %cst_52 : f32 to vector<8x128xf32>
    %114 = arith.divf %113, %112 : vector<8x128xf32>
    %115 = vector.extract_strided_slice %98 {offsets = [0, 256], sizes = [8, 128], strides = [1, 1]} : vector<8x512xf32> to vector<8x128xf32>
    %cst_53 = arith.constant 0.000000e+00 : f32
    %116 = vector.broadcast %cst_53 : f32 to vector<8x128xf32>
    %117 = arith.subf %116, %115 : vector<8x128xf32>
    %118 = math.exp %117 : vector<8x128xf32>
    %cst_54 = arith.constant 1.000000e+00 : f32
    %119 = vector.broadcast %cst_54 : f32 to vector<8x128xf32>
    %120 = arith.addf %119, %118 : vector<8x128xf32>
    %cst_55 = arith.constant 1.000000e+00 : f32
    %121 = vector.broadcast %cst_55 : f32 to vector<8x128xf32>
    %122 = arith.divf %121, %120 : vector<8x128xf32>
    %123 = vector.extract_strided_slice %98 {offsets = [0, 384], sizes = [8, 128], strides = [1, 1]} : vector<8x512xf32> to vector<8x128xf32>
    %124 = math.tanh %123 : vector<8x128xf32>
    %125 = arith.mulf %106, %87 : vector<8x128xf32>
    %126 = arith.mulf %114, %124 : vector<8x128xf32>
    %127 = arith.addf %125, %126 : vector<8x128xf32>
    %128 = math.tanh %127 : vector<8x128xf32>
    %129 = arith.mulf %122, %128 : vector<8x128xf32>
    %130 = arith.index_cast %c2_i32 : i32 to index
    %c0_56 = arith.constant 0 : index
    %c0_57 = arith.constant 0 : index
    %131 = vector.load %arg7[%130, %c0_56, %c0_57] : memref<8x8x128xf32, #tpu.memory_space<vmem>>, vector<1x8x128xf32>
    %132 = vector.shape_cast %131 : vector<1x8x128xf32> to vector<8x128xf32>
    %133 = vector.shape_cast %129 : vector<8x128xf32> to vector<1x8x128xf32>
    tpu.vector_store %arg7[%130, %c0_56, %c0_57], %133 {strides = array<i32>} : memref<8x8x128xf32, #tpu.memory_space<vmem>>, vector<1x8x128xf32>,
    %cst_58 = arith.constant dense<0.000000e+00> : vector<8x512xf32>
    %134 = tpu.matmul %129, %12, %cst_58 {dimension_numbers = #tpu.dot_dimension_numbers<[1], [0], [0], [1], [0, 0, 1, 1], [], []>} : vector<8x128xf32>, vector<128x512xf32>, vector<8x512xf32> -> vector<8x512xf32>
    %c3_i32 = arith.constant 3 : i32
    %135 = arith.index_cast %c3_i32 : i32 to index
    %c0_59 = arith.constant 0 : index
    %c0_60 = arith.constant 0 : index
    %136 = vector.load %arg11[%135, %c0_59, %c0_60] : memref<8x8x512xf32, #tpu.memory_space<vmem>>, vector<1x8x512xf32>
    %137 = vector.shape_cast %136 : vector<1x8x512xf32> to vector<8x512xf32>
    %138 = arith.addf %137, %134 : vector<8x512xf32>
    %139 = vector.extract_strided_slice %138 {offsets = [0, 0], sizes = [8, 128], strides = [1, 1]} : vector<8x512xf32> to vector<8x128xf32>
    %cst_61 = arith.constant 0.000000e+00 : f32
    %140 = vector.broadcast %cst_61 : f32 to vector<8x128xf32>
    %141 = arith.subf %140, %139 : vector<8x128xf32>
    %142 = math.exp %141 : vector<8x128xf32>
    %cst_62 = arith.constant 1.000000e+00 : f32
    %143 = vector.broadcast %cst_62 : f32 to vector<8x128xf32>
    %144 = arith.addf %143, %142 : vector<8x128xf32>
    %cst_63 = arith.constant 1.000000e+00 : f32
    %145 = vector.broadcast %cst_63 : f32 to vector<8x128xf32>
    %146 = arith.divf %145, %144 : vector<8x128xf32>
    %147 = vector.extract_strided_slice %138 {offsets = [0, 128], sizes = [8, 128], strides = [1, 1]} : vector<8x512xf32> to vector<8x128xf32>
    %cst_64 = arith.constant 0.000000e+00 : f32
    %148 = vector.broadcast %cst_64 : f32 to vector<8x128xf32>
    %149 = arith.subf %148, %147 : vector<8x128xf32>
    %150 = math.exp %149 : vector<8x128xf32>
    %cst_65 = arith.constant 1.000000e+00 : f32
    %151 = vector.broadcast %cst_65 : f32 to vector<8x128xf32>
    %152 = arith.addf %151, %150 : vector<8x128xf32>
    %cst_66 = arith.constant 1.000000e+00 : f32
    %153 = vector.broadcast %cst_66 : f32 to vector<8x128xf32>
    %154 = arith.divf %153, %152 : vector<8x128xf32>
    %155 = vector.extract_strided_slice %138 {offsets = [0, 256], sizes = [8, 128], strides = [1, 1]} : vector<8x512xf32> to vector<8x128xf32>
    %cst_67 = arith.constant 0.000000e+00 : f32
    %156 = vector.broadcast %cst_67 : f32 to vector<8x128xf32>
    %157 = arith.subf %156, %155 : vector<8x128xf32>
    %158 = math.exp %157 : vector<8x128xf32>
    %cst_68 = arith.constant 1.000000e+00 : f32
    %159 = vector.broadcast %cst_68 : f32 to vector<8x128xf32>
    %160 = arith.addf %159, %158 : vector<8x128xf32>
    %cst_69 = arith.constant 1.000000e+00 : f32
    %161 = vector.broadcast %cst_69 : f32 to vector<8x128xf32>
    %162 = arith.divf %161, %160 : vector<8x128xf32>
    %163 = vector.extract_strided_slice %138 {offsets = [0, 384], sizes = [8, 128], strides = [1, 1]} : vector<8x512xf32> to vector<8x128xf32>
    %164 = math.tanh %163 : vector<8x128xf32>
    %165 = arith.mulf %146, %127 : vector<8x128xf32>
    %166 = arith.mulf %154, %164 : vector<8x128xf32>
    %167 = arith.addf %165, %166 : vector<8x128xf32>
    %168 = math.tanh %167 : vector<8x128xf32>
    %169 = arith.mulf %162, %168 : vector<8x128xf32>
    %170 = arith.index_cast %c3_i32 : i32 to index
    %c0_70 = arith.constant 0 : index
    %c0_71 = arith.constant 0 : index
    %171 = vector.load %arg7[%170, %c0_70, %c0_71] : memref<8x8x128xf32, #tpu.memory_space<vmem>>, vector<1x8x128xf32>
    %172 = vector.shape_cast %171 : vector<1x8x128xf32> to vector<8x128xf32>
    %173 = vector.shape_cast %169 : vector<8x128xf32> to vector<1x8x128xf32>
    tpu.vector_store %arg7[%170, %c0_70, %c0_71], %173 {strides = array<i32>} : memref<8x8x128xf32, #tpu.memory_space<vmem>>, vector<1x8x128xf32>,
    %cst_72 = arith.constant dense<0.000000e+00> : vector<8x512xf32>
    %174 = tpu.matmul %169, %12, %cst_72 {dimension_numbers = #tpu.dot_dimension_numbers<[1], [0], [0], [1], [0, 0, 1, 1], [], []>} : vector<8x128xf32>, vector<128x512xf32>, vector<8x512xf32> -> vector<8x512xf32>
    %c4_i32 = arith.constant 4 : i32
    %175 = arith.index_cast %c4_i32 : i32 to index
    %c0_73 = arith.constant 0 : index
    %c0_74 = arith.constant 0 : index
    %176 = vector.load %arg11[%175, %c0_73, %c0_74] : memref<8x8x512xf32, #tpu.memory_space<vmem>>, vector<1x8x512xf32>
    %177 = vector.shape_cast %176 : vector<1x8x512xf32> to vector<8x512xf32>
    %178 = arith.addf %177, %174 : vector<8x512xf32>
    %179 = vector.extract_strided_slice %178 {offsets = [0, 0], sizes = [8, 128], strides = [1, 1]} : vector<8x512xf32> to vector<8x128xf32>
    %cst_75 = arith.constant 0.000000e+00 : f32
    %180 = vector.broadcast %cst_75 : f32 to vector<8x128xf32>
    %181 = arith.subf %180, %179 : vector<8x128xf32>
    %182 = math.exp %181 : vector<8x128xf32>
    %cst_76 = arith.constant 1.000000e+00 : f32
    %183 = vector.broadcast %cst_76 : f32 to vector<8x128xf32>
    %184 = arith.addf %183, %182 : vector<8x128xf32>
    %cst_77 = arith.constant 1.000000e+00 : f32
    %185 = vector.broadcast %cst_77 : f32 to vector<8x128xf32>
    %186 = arith.divf %185, %184 : vector<8x128xf32>
    %187 = vector.extract_strided_slice %178 {offsets = [0, 128], sizes = [8, 128], strides = [1, 1]} : vector<8x512xf32> to vector<8x128xf32>
    %cst_78 = arith.constant 0.000000e+00 : f32
    %188 = vector.broadcast %cst_78 : f32 to vector<8x128xf32>
    %189 = arith.subf %188, %187 : vector<8x128xf32>
    %190 = math.exp %189 : vector<8x128xf32>
    %cst_79 = arith.constant 1.000000e+00 : f32
    %191 = vector.broadcast %cst_79 : f32 to vector<8x128xf32>
    %192 = arith.addf %191, %190 : vector<8x128xf32>
    %cst_80 = arith.constant 1.000000e+00 : f32
    %193 = vector.broadcast %cst_80 : f32 to vector<8x128xf32>
    %194 = arith.divf %193, %192 : vector<8x128xf32>
    %195 = vector.extract_strided_slice %178 {offsets = [0, 256], sizes = [8, 128], strides = [1, 1]} : vector<8x512xf32> to vector<8x128xf32>
    %cst_81 = arith.constant 0.000000e+00 : f32
    %196 = vector.broadcast %cst_81 : f32 to vector<8x128xf32>
    %197 = arith.subf %196, %195 : vector<8x128xf32>
    %198 = math.exp %197 : vector<8x128xf32>
    %cst_82 = arith.constant 1.000000e+00 : f32
    %199 = vector.broadcast %cst_82 : f32 to vector<8x128xf32>
    %200 = arith.addf %199, %198 : vector<8x128xf32>
    %cst_83 = arith.constant 1.000000e+00 : f32
    %201 = vector.broadcast %cst_83 : f32 to vector<8x128xf32>
    %202 = arith.divf %201, %200 : vector<8x128xf32>
    %203 = vector.extract_strided_slice %178 {offsets = [0, 384], sizes = [8, 128], strides = [1, 1]} : vector<8x512xf32> to vector<8x128xf32>
    %204 = math.tanh %203 : vector<8x128xf32>
    %205 = arith.mulf %186, %167 : vector<8x128xf32>
    %206 = arith.mulf %194, %204 : vector<8x128xf32>
    %207 = arith.addf %205, %206 : vector<8x128xf32>
    %208 = math.tanh %207 : vector<8x128xf32>
    %209 = arith.mulf %202, %208 : vector<8x128xf32>
    %210 = arith.index_cast %c4_i32 : i32 to index
    %c0_84 = arith.constant 0 : index
    %c0_85 = arith.constant 0 : index
    %211 = vector.load %arg7[%210, %c0_84, %c0_85] : memref<8x8x128xf32, #tpu.memory_space<vmem>>, vector<1x8x128xf32>
    %212 = vector.shape_cast %211 : vector<1x8x128xf32> to vector<8x128xf32>
    %213 = vector.shape_cast %209 : vector<8x128xf32> to vector<1x8x128xf32>
    tpu.vector_store %arg7[%210, %c0_84, %c0_85], %213 {strides = array<i32>} : memref<8x8x128xf32, #tpu.memory_space<vmem>>, vector<1x8x128xf32>,
    %cst_86 = arith.constant dense<0.000000e+00> : vector<8x512xf32>
    %214 = tpu.matmul %209, %12, %cst_86 {dimension_numbers = #tpu.dot_dimension_numbers<[1], [0], [0], [1], [0, 0, 1, 1], [], []>} : vector<8x128xf32>, vector<128x512xf32>, vector<8x512xf32> -> vector<8x512xf32>
    %c5_i32 = arith.constant 5 : i32
    %215 = arith.index_cast %c5_i32 : i32 to index
    %c0_87 = arith.constant 0 : index
    %c0_88 = arith.constant 0 : index
    %216 = vector.load %arg11[%215, %c0_87, %c0_88] : memref<8x8x512xf32, #tpu.memory_space<vmem>>, vector<1x8x512xf32>
    %217 = vector.shape_cast %216 : vector<1x8x512xf32> to vector<8x512xf32>
    %218 = arith.addf %217, %214 : vector<8x512xf32>
    %219 = vector.extract_strided_slice %218 {offsets = [0, 0], sizes = [8, 128], strides = [1, 1]} : vector<8x512xf32> to vector<8x128xf32>
    %cst_89 = arith.constant 0.000000e+00 : f32
    %220 = vector.broadcast %cst_89 : f32 to vector<8x128xf32>
    %221 = arith.subf %220, %219 : vector<8x128xf32>
    %222 = math.exp %221 : vector<8x128xf32>
    %cst_90 = arith.constant 1.000000e+00 : f32
    %223 = vector.broadcast %cst_90 : f32 to vector<8x128xf32>
    %224 = arith.addf %223, %222 : vector<8x128xf32>
    %cst_91 = arith.constant 1.000000e+00 : f32
    %225 = vector.broadcast %cst_91 : f32 to vector<8x128xf32>
    %226 = arith.divf %225, %224 : vector<8x128xf32>
    %227 = vector.extract_strided_slice %218 {offsets = [0, 128], sizes = [8, 128], strides = [1, 1]} : vector<8x512xf32> to vector<8x128xf32>
    %cst_92 = arith.constant 0.000000e+00 : f32
    %228 = vector.broadcast %cst_92 : f32 to vector<8x128xf32>
    %229 = arith.subf %228, %227 : vector<8x128xf32>
    %230 = math.exp %229 : vector<8x128xf32>
    %cst_93 = arith.constant 1.000000e+00 : f32
    %231 = vector.broadcast %cst_93 : f32 to vector<8x128xf32>
    %232 = arith.addf %231, %230 : vector<8x128xf32>
    %cst_94 = arith.constant 1.000000e+00 : f32
    %233 = vector.broadcast %cst_94 : f32 to vector<8x128xf32>
    %234 = arith.divf %233, %232 : vector<8x128xf32>
    %235 = vector.extract_strided_slice %218 {offsets = [0, 256], sizes = [8, 128], strides = [1, 1]} : vector<8x512xf32> to vector<8x128xf32>
    %cst_95 = arith.constant 0.000000e+00 : f32
    %236 = vector.broadcast %cst_95 : f32 to vector<8x128xf32>
    %237 = arith.subf %236, %235 : vector<8x128xf32>
    %238 = math.exp %237 : vector<8x128xf32>
    %cst_96 = arith.constant 1.000000e+00 : f32
    %239 = vector.broadcast %cst_96 : f32 to vector<8x128xf32>
    %240 = arith.addf %239, %238 : vector<8x128xf32>
    %cst_97 = arith.constant 1.000000e+00 : f32
    %241 = vector.broadcast %cst_97 : f32 to vector<8x128xf32>
    %242 = arith.divf %241, %240 : vector<8x128xf32>
    %243 = vector.extract_strided_slice %218 {offsets = [0, 384], sizes = [8, 128], strides = [1, 1]} : vector<8x512xf32> to vector<8x128xf32>
    %244 = math.tanh %243 : vector<8x128xf32>
    %245 = arith.mulf %226, %207 : vector<8x128xf32>
    %246 = arith.mulf %234, %244 : vector<8x128xf32>
    %247 = arith.addf %245, %246 : vector<8x128xf32>
    %248 = math.tanh %247 : vector<8x128xf32>
    %249 = arith.mulf %242, %248 : vector<8x128xf32>
    %250 = arith.index_cast %c5_i32 : i32 to index
    %c0_98 = arith.constant 0 : index
    %c0_99 = arith.constant 0 : index
    %251 = vector.load %arg7[%250, %c0_98, %c0_99] : memref<8x8x128xf32, #tpu.memory_space<vmem>>, vector<1x8x128xf32>
    %252 = vector.shape_cast %251 : vector<1x8x128xf32> to vector<8x128xf32>
    %253 = vector.shape_cast %249 : vector<8x128xf32> to vector<1x8x128xf32>
    tpu.vector_store %arg7[%250, %c0_98, %c0_99], %253 {strides = array<i32>} : memref<8x8x128xf32, #tpu.memory_space<vmem>>, vector<1x8x128xf32>,
    %cst_100 = arith.constant dense<0.000000e+00> : vector<8x512xf32>
    %254 = tpu.matmul %249, %12, %cst_100 {dimension_numbers = #tpu.dot_dimension_numbers<[1], [0], [0], [1], [0, 0, 1, 1], [], []>} : vector<8x128xf32>, vector<128x512xf32>, vector<8x512xf32> -> vector<8x512xf32>
    %c6_i32 = arith.constant 6 : i32
    %255 = arith.index_cast %c6_i32 : i32 to index
    %c0_101 = arith.constant 0 : index
    %c0_102 = arith.constant 0 : index
    %256 = vector.load %arg11[%255, %c0_101, %c0_102] : memref<8x8x512xf32, #tpu.memory_space<vmem>>, vector<1x8x512xf32>
    %257 = vector.shape_cast %256 : vector<1x8x512xf32> to vector<8x512xf32>
    %258 = arith.addf %257, %254 : vector<8x512xf32>
    %259 = vector.extract_strided_slice %258 {offsets = [0, 0], sizes = [8, 128], strides = [1, 1]} : vector<8x512xf32> to vector<8x128xf32>
    %cst_103 = arith.constant 0.000000e+00 : f32
    %260 = vector.broadcast %cst_103 : f32 to vector<8x128xf32>
    %261 = arith.subf %260, %259 : vector<8x128xf32>
    %262 = math.exp %261 : vector<8x128xf32>
    %cst_104 = arith.constant 1.000000e+00 : f32
    %263 = vector.broadcast %cst_104 : f32 to vector<8x128xf32>
    %264 = arith.addf %263, %262 : vector<8x128xf32>
    %cst_105 = arith.constant 1.000000e+00 : f32
    %265 = vector.broadcast %cst_105 : f32 to vector<8x128xf32>
    %266 = arith.divf %265, %264 : vector<8x128xf32>
    %267 = vector.extract_strided_slice %258 {offsets = [0, 128], sizes = [8, 128], strides = [1, 1]} : vector<8x512xf32> to vector<8x128xf32>
    %cst_106 = arith.constant 0.000000e+00 : f32
    %268 = vector.broadcast %cst_106 : f32 to vector<8x128xf32>
    %269 = arith.subf %268, %267 : vector<8x128xf32>
    %270 = math.exp %269 : vector<8x128xf32>
    %cst_107 = arith.constant 1.000000e+00 : f32
    %271 = vector.broadcast %cst_107 : f32 to vector<8x128xf32>
    %272 = arith.addf %271, %270 : vector<8x128xf32>
    %cst_108 = arith.constant 1.000000e+00 : f32
    %273 = vector.broadcast %cst_108 : f32 to vector<8x128xf32>
    %274 = arith.divf %273, %272 : vector<8x128xf32>
    %275 = vector.extract_strided_slice %258 {offsets = [0, 256], sizes = [8, 128], strides = [1, 1]} : vector<8x512xf32> to vector<8x128xf32>
    %cst_109 = arith.constant 0.000000e+00 : f32
    %276 = vector.broadcast %cst_109 : f32 to vector<8x128xf32>
    %277 = arith.subf %276, %275 : vector<8x128xf32>
    %278 = math.exp %277 : vector<8x128xf32>
    %cst_110 = arith.constant 1.000000e+00 : f32
    %279 = vector.broadcast %cst_110 : f32 to vector<8x128xf32>
    %280 = arith.addf %279, %278 : vector<8x128xf32>
    %cst_111 = arith.constant 1.000000e+00 : f32
    %281 = vector.broadcast %cst_111 : f32 to vector<8x128xf32>
    %282 = arith.divf %281, %280 : vector<8x128xf32>
    %283 = vector.extract_strided_slice %258 {offsets = [0, 384], sizes = [8, 128], strides = [1, 1]} : vector<8x512xf32> to vector<8x128xf32>
    %284 = math.tanh %283 : vector<8x128xf32>
    %285 = arith.mulf %266, %247 : vector<8x128xf32>
    %286 = arith.mulf %274, %284 : vector<8x128xf32>
    %287 = arith.addf %285, %286 : vector<8x128xf32>
    %288 = math.tanh %287 : vector<8x128xf32>
    %289 = arith.mulf %282, %288 : vector<8x128xf32>
    %290 = arith.index_cast %c6_i32 : i32 to index
    %c0_112 = arith.constant 0 : index
    %c0_113 = arith.constant 0 : index
    %291 = vector.load %arg7[%290, %c0_112, %c0_113] : memref<8x8x128xf32, #tpu.memory_space<vmem>>, vector<1x8x128xf32>
    %292 = vector.shape_cast %291 : vector<1x8x128xf32> to vector<8x128xf32>
    %293 = vector.shape_cast %289 : vector<8x128xf32> to vector<1x8x128xf32>
    tpu.vector_store %arg7[%290, %c0_112, %c0_113], %293 {strides = array<i32>} : memref<8x8x128xf32, #tpu.memory_space<vmem>>, vector<1x8x128xf32>,
    %cst_114 = arith.constant dense<0.000000e+00> : vector<8x512xf32>
    %294 = tpu.matmul %289, %12, %cst_114 {dimension_numbers = #tpu.dot_dimension_numbers<[1], [0], [0], [1], [0, 0, 1, 1], [], []>} : vector<8x128xf32>, vector<128x512xf32>, vector<8x512xf32> -> vector<8x512xf32>
    %c7_i32 = arith.constant 7 : i32
    %295 = arith.index_cast %c7_i32 : i32 to index
    %c0_115 = arith.constant 0 : index
    %c0_116 = arith.constant 0 : index
    %296 = vector.load %arg11[%295, %c0_115, %c0_116] : memref<8x8x512xf32, #tpu.memory_space<vmem>>, vector<1x8x512xf32>
    %297 = vector.shape_cast %296 : vector<1x8x512xf32> to vector<8x512xf32>
    %298 = arith.addf %297, %294 : vector<8x512xf32>
    %299 = vector.extract_strided_slice %298 {offsets = [0, 0], sizes = [8, 128], strides = [1, 1]} : vector<8x512xf32> to vector<8x128xf32>
    %cst_117 = arith.constant 0.000000e+00 : f32
    %300 = vector.broadcast %cst_117 : f32 to vector<8x128xf32>
    %301 = arith.subf %300, %299 : vector<8x128xf32>
    %302 = math.exp %301 : vector<8x128xf32>
    %cst_118 = arith.constant 1.000000e+00 : f32
    %303 = vector.broadcast %cst_118 : f32 to vector<8x128xf32>
    %304 = arith.addf %303, %302 : vector<8x128xf32>
    %cst_119 = arith.constant 1.000000e+00 : f32
    %305 = vector.broadcast %cst_119 : f32 to vector<8x128xf32>
    %306 = arith.divf %305, %304 : vector<8x128xf32>
    %307 = vector.extract_strided_slice %298 {offsets = [0, 128], sizes = [8, 128], strides = [1, 1]} : vector<8x512xf32> to vector<8x128xf32>
    %cst_120 = arith.constant 0.000000e+00 : f32
    %308 = vector.broadcast %cst_120 : f32 to vector<8x128xf32>
    %309 = arith.subf %308, %307 : vector<8x128xf32>
    %310 = math.exp %309 : vector<8x128xf32>
    %cst_121 = arith.constant 1.000000e+00 : f32
    %311 = vector.broadcast %cst_121 : f32 to vector<8x128xf32>
    %312 = arith.addf %311, %310 : vector<8x128xf32>
    %cst_122 = arith.constant 1.000000e+00 : f32
    %313 = vector.broadcast %cst_122 : f32 to vector<8x128xf32>
    %314 = arith.divf %313, %312 : vector<8x128xf32>
    %315 = vector.extract_strided_slice %298 {offsets = [0, 256], sizes = [8, 128], strides = [1, 1]} : vector<8x512xf32> to vector<8x128xf32>
    %cst_123 = arith.constant 0.000000e+00 : f32
    %316 = vector.broadcast %cst_123 : f32 to vector<8x128xf32>
    %317 = arith.subf %316, %315 : vector<8x128xf32>
    %318 = math.exp %317 : vector<8x128xf32>
    %cst_124 = arith.constant 1.000000e+00 : f32
    %319 = vector.broadcast %cst_124 : f32 to vector<8x128xf32>
    %320 = arith.addf %319, %318 : vector<8x128xf32>
    %cst_125 = arith.constant 1.000000e+00 : f32
    %321 = vector.broadcast %cst_125 : f32 to vector<8x128xf32>
    %322 = arith.divf %321, %320 : vector<8x128xf32>
    %323 = vector.extract_strided_slice %298 {offsets = [0, 384], sizes = [8, 128], strides = [1, 1]} : vector<8x512xf32> to vector<8x128xf32>
    %324 = math.tanh %323 : vector<8x128xf32>
    %325 = arith.mulf %306, %287 : vector<8x128xf32>
    %326 = arith.mulf %314, %324 : vector<8x128xf32>
    %327 = arith.addf %325, %326 : vector<8x128xf32>
    %328 = math.tanh %327 : vector<8x128xf32>
    %329 = arith.mulf %322, %328 : vector<8x128xf32>
    %330 = arith.index_cast %c7_i32 : i32 to index
    %c0_126 = arith.constant 0 : index
    %c0_127 = arith.constant 0 : index
    %331 = vector.load %arg7[%330, %c0_126, %c0_127] : memref<8x8x128xf32, #tpu.memory_space<vmem>>, vector<1x8x128xf32>
    %332 = vector.shape_cast %331 : vector<1x8x128xf32> to vector<8x128xf32>
    %333 = vector.shape_cast %329 : vector<8x128xf32> to vector<1x8x128xf32>
    tpu.vector_store %arg7[%330, %c0_126, %c0_127], %333 {strides = array<i32>} : memref<8x8x128xf32, #tpu.memory_space<vmem>>, vector<1x8x128xf32>,
    %cst_128 = arith.constant dense<0.000000e+00> : vector<8x512xf32>
    %334 = tpu.matmul %329, %12, %cst_128 {dimension_numbers = #tpu.dot_dimension_numbers<[1], [0], [0], [1], [0, 0, 1, 1], [], []>} : vector<8x128xf32>, vector<128x512xf32>, vector<8x512xf32> -> vector<8x512xf32>
    %c8_i32 = arith.constant 8 : i32
    %c0_129 = arith.constant 0 : index
    %c0_130 = arith.constant 0 : index
    %335 = vector.load %arg9[%c0_129, %c0_130] : memref<8x512xf32, #tpu.memory_space<vmem>>, vector<8x512xf32>
    tpu.vector_store %arg9[%c0_129, %c0_130], %334 {strides = array<i32>} : memref<8x512xf32, #tpu.memory_space<vmem>>, vector<8x512xf32>,
    %c0_131 = arith.constant 0 : index
    %c0_132 = arith.constant 0 : index
    %336 = vector.load %arg10[%c0_131, %c0_132] : memref<8x128xf32, #tpu.memory_space<vmem>>, vector<8x128xf32>
    tpu.vector_store %arg10[%c0_131, %c0_132], %327 {strides = array<i32>} : memref<8x128xf32, #tpu.memory_space<vmem>>, vector<8x128xf32>,
    %c0_133 = arith.constant 0 : index
    %c0_134 = arith.constant 0 : index
    %337 = vector.load %arg8[%c0_133, %c0_134] : memref<8x128xf32, #tpu.memory_space<vmem>>, vector<8x128xf32>
    tpu.vector_store %arg8[%c0_133, %c0_134], %327 {strides = array<i32>} : memref<8x128xf32, #tpu.memory_space<vmem>>, vector<8x128xf32>,
    return
  }
  func.func @transform_0(%arg0: i32) -> (i32, i32, i32) {
    %c0_i32 = arith.constant 0 : i32
    %c0_i32_0 = arith.constant 0 : i32
    %c0_i32_1 = arith.constant 0 : i32
    return %arg0, %c0_i32, %c0_i32_0 : i32, i32, i32
  }
  func.func @transform_1(%arg0: i32) -> (i32, i32) {
    %c0_i32 = arith.constant 0 : i32
    %c0_i32_0 = arith.constant 0 : i32
    %c0_i32_1 = arith.constant 0 : i32
    return %c0_i32, %c0_i32_0 : i32, i32
  }
  func.func @transform_2(%arg0: i32) -> (i32, i32) {
    %c0_i32 = arith.constant 0 : i32
    %c0_i32_0 = arith.constant 0 : i32
    %c0_i32_1 = arith.constant 0 : i32
    return %c0_i32, %c0_i32_0 : i32, i32
  }
  func.func @transform_3(%arg0: i32) -> (i32, i32) {
    %c0_i32 = arith.constant 0 : i32
    %c0_i32_0 = arith.constant 0 : i32
    %c0_i32_1 = arith.constant 0 : i32
    return %c0_i32, %c0_i32_0 : i32, i32
  }
  func.func @transform_4(%arg0: i32) -> (i32, i32) {
    %c0_i32 = arith.constant 0 : i32
    %c0_i32_0 = arith.constant 0 : i32
    %c0_i32_1 = arith.constant 0 : i32
    return %c0_i32, %c0_i32_0 : i32, i32
  }
  func.func @transform_5(%arg0: i32) -> (i32, i32) {
    %c0_i32 = arith.constant 0 : i32
    %c0_i32_0 = arith.constant 0 : i32
    %c0_i32_1 = arith.constant 0 : i32
    return %c0_i32, %c0_i32_0 : i32, i32
  }
  func.func @transform_6(%arg0: i32) -> (i32, i32, i32) {
    %c0_i32 = arith.constant 0 : i32
    %c0_i32_0 = arith.constant 0 : i32
    %c0_i32_1 = arith.constant 0 : i32
    return %arg0, %c0_i32, %c0_i32_0 : i32, i32, i32
  }
  func.func @transform_7(%arg0: i32) -> (i32, i32) {
    %c0_i32 = arith.constant 0 : i32
    %c0_i32_0 = arith.constant 0 : i32
    %c0_i32_1 = arith.constant 0 : i32
    return %c0_i32, %c0_i32_0 : i32, i32
  }
}

</mosaic_0001>

<llo_original>
// kernel: tpu_custom_call.1
$region0: #{tpu_custom_call.1}
  #allocation0 [shape = 'u32[]', space=smem, size = 0x4, offset = 0x4, fixed_abs, tag = 'smem constant byte address 0x4 - core index']
  #allocation1 [shape = 'u32[72,128]{1,0:T(1,128)}', space=vmem, size = 0x9000, scoped, tag = 'internal scratch']
  #allocation2 [shape = 'f32[8,512]{1,0:T(8,128)}', space=vmem, size = 0x4000, scoped, tag = 'scratch operand']
  #allocation3 [shape = 'f32[8,128]{1,0:T(8,128)}', space=vmem, size = 0x1000, scoped, tag = 'scratch operand']
  #allocation4 [shape = 'f32[8,8,512]{2,1,0:T(8,128)}', space=vmem, size = 0x20000, scoped, tag = 'scratch operand']
  %s0 = inlined_call_operand.hbm [shape: f32[8,8,128], index: 0, kind: input, shape index: {}]
  %s1 = inlined_call_operand.hbm [shape: f32[128,512], index: 1, kind: input, shape index: {}]
  %s2 = inlined_call_operand.hbm [shape: f32[128,512], index: 2, kind: input, shape index: {}]
  %s3 = inlined_call_operand.hbm [shape: f32[1,512], index: 3, kind: input, shape index: {}]
  %s4 = inlined_call_operand.hbm [shape: f32[8,128], index: 4, kind: input, shape index: {}]
  %s5 = inlined_call_operand.hbm [shape: f32[8,128], index: 5, kind: input, shape index: {}]
  %s6 = inlined_call_operand.hbm [shape: f32[8,8,128], index: 6, kind: output, shape index: {0}]
  %s7 = inlined_call_operand.hbm [shape: f32[8,128], index: 7, kind: output, shape index: {1}]
  %8 = xla_tuple %s6, %s7
  %s9 = sld [smem:[#allocation0]]
  $region70: #{tpu_custom_call.1} parent=0
    _
  %s11 = ssub.s32 1, %s9
  %s12 = scalar_select 0, %s11, %s9
  $region1: #{tpu_custom_call.1} parent=0
    #allocation5 [shape = 'u8[32768]{0}', space=vmem, size = 0x8000, scoped, tag = 'input window, operand 0, single buffered']
    #allocation6 [shape = 's32[1]{0}', space=sflag, size = 0x4, scoped, tag = 'scoped memory for tpu_custom_call.1']
    #allocation7 [shape = 's32[1]{0}', space=sflag, size = 0x4, scoped, tag = 'scoped memory for tpu_custom_call.1']
    #allocation8 [shape = 'u8[262144]{0}', space=vmem, size = 0x40000, scoped, tag = 'input window, operand 1, single buffered']
    #allocation9 [shape = 's32[1]{0}', space=sflag, size = 0x4, scoped, tag = 'scoped memory for tpu_custom_call.1']
    #allocation10 [shape = 'u8[262144]{0}', space=vmem, size = 0x40000, scoped, tag = 'input window, operand 2, single buffered']
    #allocation11 [shape = 'u8[2048]{0}', space=vmem, size = 0x800, scoped, tag = 'input window, operand 3, single buffered']
    #allocation12 [shape = 's32[1]{0}', space=sflag, size = 0x4, scoped, tag = 'scoped memory for tpu_custom_call.1']
    #allocation13 [shape = 'u8[4096]{0}', space=vmem, size = 0x1000, scoped, tag = 'input window, operand 4, single buffered']
    #allocation14 [shape = 'u8[4096]{0}', space=vmem, size = 0x1000, scoped, tag = 'input window, operand 5, single buffered']
    #allocation15 [shape = 's32[1]{0}', space=sflag, size = 0x4, scoped, tag = 'scoped memory for tpu_custom_call.1']
    #allocation16 [shape = 'u8[32768]{0}', space=vmem, size = 0x8000, scoped, tag = 'output window, operand 0, single buffered']
    #allocation17 [shape = 'u8[4096]{0}', space=vmem, size = 0x1000, scoped, tag = 'output window, operand 1, single buffered']
    #allocation18 [shape = 's32[1]{0}', space=sflag, size = 0x4, scoped, tag = 'scoped memory for tpu_custom_call.1']
    %13 = vsyncpa [#allocation6], 0
    %14 = vsyncpa [#allocation9], 0
    %15 = vsyncpa [#allocation12], 0
    %16 = vsyncpa [#allocation15], 0
    %17 = vsyncpa [#allocation7], 0
    %18 = vsyncpa [#allocation18], 0
    // Predicated region
    $region2: #{tpu_custom_call.1} parent=1 // pred_check
      _
    $region3: #{tpu_custom_call.1} parent=1 // pred_check_branch
      %20 = sbr.rel (0) target = $region5
    $region4: #{tpu_custom_call.1} parent=1 // pred_region
      %22 = vsyncadd [#allocation6], 0
      %s23 = sshll.u32 %s0, 4
      %s24 = int_to_ptr.hbm [resolvable:$true] %s23
      %s25 = sshll.u32 [#allocation5], 4
      %s26 = int_to_ptr.vmem [resolvable:$true] %s25
      %31 = dma.hbm_to_vmem [thread:$0]  %s24, 1024, %s26, [#allocation6], 128, 128, 8
    $region5: #{tpu_custom_call.1} parent=1 // pred_fallthru
      _
    // Predicated region
    $region6: #{tpu_custom_call.1} parent=1 // pred_check
      _
    $region7: #{tpu_custom_call.1} parent=1 // pred_check_branch
      %33 = sbr.rel (0) target = $region9
    $region8: #{tpu_custom_call.1} parent=1 // pred_region
      %35 = vsyncadd [#allocation9], 0
      %s36 = sshll.u32 %s1, 4
      %s37 = int_to_ptr.hbm [resolvable:$true] %s36
      %s38 = sshll.u32 [#allocation8], 4
      %s39 = int_to_ptr.vmem [resolvable:$true] %s38
      %44 = dma.hbm_to_vmem [thread:$0]  %s37, 8192, %s39, [#allocation9], 512, 512, 32
    $region9: #{tpu_custom_call.1} parent=1 // pred_fallthru
      _
    // Predicated region
    $region10: #{tpu_custom_call.1} parent=1 // pred_check
      _
    $region11: #{tpu_custom_call.1} parent=1 // pred_check_branch
      %46 = sbr.rel (0) target = $region13
    $region12: #{tpu_custom_call.1} parent=1 // pred_region
      %48 = vsyncadd [#allocation9], 0
      %s49 = sshll.u32 %s2, 4
      %s50 = int_to_ptr.hbm [resolvable:$true] %s49
      %s51 = sshll.u32 [#allocation10], 4
      %s52 = int_to_ptr.vmem [resolvable:$true] %s51
      %57 = dma.hbm_to_vmem [thread:$0]  %s50, 8192, %s52, [#allocation9], 512, 512, 32
    $region13: #{tpu_custom_call.1} parent=1 // pred_fallthru
      _
    // Predicated region
    $region14: #{tpu_custom_call.1} parent=1 // pred_check
      _
    $region15: #{tpu_custom_call.1} parent=1 // pred_check_branch
      %59 = sbr.rel (0) target = $region17
    $region16: #{tpu_custom_call.1} parent=1 // pred_region
      %61 = vsyncadd [#allocation12], 0
      %s63 = sshll.u32 %s3, 4
      %s64 = int_to_ptr.hbm [resolvable:$true] %s63
      %s65 = sshll.u32 [#allocation11], 4
      %s66 = int_to_ptr.vmem [resolvable:$true] %s65
      %68 = dma.hbm_to_vmem [thread:$0]  %s64, 64, %s66, [#allocation12]
    $region17: #{tpu_custom_call.1} parent=1 // pred_fallthru
      _
    // Predicated region
    $region18: #{tpu_custom_call.1} parent=1 // pred_check
      _
    $region19: #{tpu_custom_call.1} parent=1 // pred_check_branch
      %70 = sbr.rel (0) target = $region21
    $region20: #{tpu_custom_call.1} parent=1 // pred_region
      %72 = vsyncadd [#allocation12], 0
      %s74 = sshll.u32 %s4, 4
      %s75 = int_to_ptr.hbm [resolvable:$true] %s74
      %s76 = sshll.u32 [#allocation13], 4
      %s77 = int_to_ptr.vmem [resolvable:$true] %s76
      %79 = dma.hbm_to_vmem [thread:$0]  %s75, 128, %s77, [#allocation12]
    $region21: #{tpu_custom_call.1} parent=1 // pred_fallthru
      _
    // Predicated region
    $region22: #{tpu_custom_call.1} parent=1 // pred_check
      _
    $region23: #{tpu_custom_call.1} parent=1 // pred_check_branch
      %81 = sbr.rel (0) target = $region25
    $region24: #{tpu_custom_call.1} parent=1 // pred_region
      %83 = vsyncadd [#allocation15], 0
      %s85 = sshll.u32 %s5, 4
      %s86 = int_to_ptr.hbm [resolvable:$true] %s85
      %s87 = sshll.u32 [#allocation14], 4
      %s88 = int_to_ptr.vmem [resolvable:$true] %s87
      %90 = dma.hbm_to_vmem [thread:$0]  %s86, 128, %s88, [#allocation15]
    $region25: #{tpu_custom_call.1} parent=1 // pred_fallthru
      _
    // Predicated region
    $region26: #{tpu_custom_call.1} parent=1 // pred_check
      _
    $region27: #{tpu_custom_call.1} parent=1 // pred_check_branch
      %92 = sbr.rel (0) target = $region29
    $region28: #{tpu_custom_call.1} parent=1 // pred_region
      %94 = dma.done [#allocation6], 1024
    $region29: #{tpu_custom_call.1} parent=1 // pred_fallthru
      _
    // Predicated region
    $region30: #{tpu_custom_call.1} parent=1 // pred_check
      _
    $region31: #{tpu_custom_call.1} parent=1 // pred_check_branch
      %96 = sbr.rel (0) target = $region33
    $region32: #{tpu_custom_call.1} parent=1 // pred_region
      %98 = dma.done [#allocation9], 8192
    $region33: #{tpu_custom_call.1} parent=1 // pred_fallthru
      _
    // Predicated region
    $region34: #{tpu_custom_call.1} parent=1 // pred_check
      _
    $region35: #{tpu_custom_call.1} parent=1 // pred_check_branch
      %100 = sbr.rel (0) target = $region37
    $region36: #{tpu_custom_call.1} parent=1 // pred_region
      %102 = dma.done [#allocation9], 8192
    $region37: #{tpu_custom_call.1} parent=1 // pred_fallthru
      _
    // Predicated region
    $region38: #{tpu_custom_call.1} parent=1 // pred_check
      _
    $region39: #{tpu_custom_call.1} parent=1 // pred_check_branch
      %104 = sbr.rel (0) target = $region41
    $region40: #{tpu_custom_call.1} parent=1 // pred_region
      %106 = dma.done [#allocation12], 64
    $region41: #{tpu_custom_call.1} parent=1 // pred_fallthru
      _
    // Predicated region
    $region42: #{tpu_custom_call.1} parent=1 // pred_check
      _
    $region43: #{tpu_custom_call.1} parent=1 // pred_check_branch
      %108 = sbr.rel (0) target = $region45
    $region44: #{tpu_custom_call.1} parent=1 // pred_region
      %110 = dma.done [#allocation12], 128
    $region45: #{tpu_custom_call.1} parent=1 // pred_fallthru
      _
    // Predicated region
    $region46: #{tpu_custom_call.1} parent=1 // pred_check
      _
    $region47: #{tpu_custom_call.1} parent=1 // pred_check_branch
      %112 = sbr.rel (0) target = $region49
    $region48: #{tpu_custom_call.1} parent=1 // pred_region
      %114 = dma.done [#allocation15], 128
    $region49: #{tpu_custom_call.1} parent=1 // pred_fallthru
      _
    %v115 = vld [vmem:[#allocation5] sm:$0xff]
    %v116 = vld [vmem:[#allocation5 + $0x8] sm:$0xff]
    %v117 = vld [vmem:[#allocation5 + $0x10] sm:$0xff]
    %v118 = vld [vmem:[#allocation5 + $0x18] sm:$0xff]
    %v119 = vld [vmem:[#allocation5 + $0x20] sm:$0xff]
    %v120 = vld [vmem:[#allocation5 + $0x28] sm:$0xff]
    %v121 = vld [vmem:[#allocation5 + $0x30] sm:$0xff]
    %v122 = vld [vmem:[#allocation5 + $0x38] sm:$0xff]
    %v123 = vld [vmem:[#allocation8] sm:$0xff]
    %v124 = vld [vmem:[#allocation8 + $0x8] sm:$0xff]
    %v125 = vld [vmem:[#allocation8 + $0x10] sm:$0xff]
    %v126 = vld [vmem:[#allocation8 + $0x18] sm:$0xff]
    %v127 = vld [vmem:[#allocation8 + $0x20] sm:$0xff]
    %v128 = vld [vmem:[#allocation8 + $0x28] sm:$0xff]
    %v129 = vld [vmem:[#allocation8 + $0x30] sm:$0xff]
    %v130 = vld [vmem:[#allocation8 + $0x38] sm:$0xff]
    %v131 = vld [vmem:[#allocation8 + $0x40] sm:$0xff]
    %v132 = vld [vmem:[#allocation8 + $0x48] sm:$0xff]
    %v133 = vld [vmem:[#allocation8 + $0x50] sm:$0xff]
    %v134 = vld [vmem:[#allocation8 + $0x58] sm:$0xff]
    %v135 = vld [vmem:[#allocation8 + $0x60] sm:$0xff]
    %v136 = vld [vmem:[#allocation8 + $0x68] sm:$0xff]
    %v137 = vld [vmem:[#allocation8 + $0x70] sm:$0xff]
    %v138 = vld [vmem:[#allocation8 + $0x78] sm:$0xff]
    %v139 = vld [vmem:[#allocation8 + $0x80] sm:$0xff]
    %v140 = vld [vmem:[#allocation8 + $0x88] sm:$0xff]
    %v141 = vld [vmem:[#allocation8 + $0x90] sm:$0xff]
    %v142 = vld [vmem:[#allocation8 + $0x98] sm:$0xff]
    %v143 = vld [vmem:[#allocation8 + $0xa0] sm:$0xff]
    %v144 = vld [vmem:[#allocation8 + $0xa8] sm:$0xff]
    %v145 = vld [vmem:[#allocation8 + $0xb0] sm:$0xff]
    %v146 = vld [vmem:[#allocation8 + $0xb8] sm:$0xff]
    %v147 = vld [vmem:[#allocation8 + $0xc0] sm:$0xff]
    %v148 = vld [vmem:[#allocation8 + $0xc8] sm:$0xff]
    %v149 = vld [vmem:[#allocation8 + $0xd0] sm:$0xff]
    %v150 = vld [vmem:[#allocation8 + $0xd8] sm:$0xff]
    %v151 = vld [vmem:[#allocation8 + $0xe0] sm:$0xff]
    %v152 = vld [vmem:[#allocation8 + $0xe8] sm:$0xff]
    %v153 = vld [vmem:[#allocation8 + $0xf0] sm:$0xff]
    %v154 = vld [vmem:[#allocation8 + $0xf8] sm:$0xff]
    %v155 = vld [vmem:[#allocation8 + $0x100] sm:$0xff]
    %v156 = vld [vmem:[#allocation8 + $0x108] sm:$0xff]
    %v157 = vld [vmem:[#allocation8 + $0x110] sm:$0xff]
    %v158 = vld [vmem:[#allocation8 + $0x118] sm:$0xff]
    %v159 = vld [vmem:[#allocation8 + $0x120] sm:$0xff]
    %v160 = vld [vmem:[#allocation8 + $0x128] sm:$0xff]
    %v161 = vld [vmem:[#allocation8 + $0x130] sm:$0xff]
    %v162 = vld [vmem:[#allocation8 + $0x138] sm:$0xff]
    %v163 = vld [vmem:[#allocation8 + $0x140] sm:$0xff]
    %v164 = vld [vmem:[#allocation8 + $0x148] sm:$0xff]
    %v165 = vld [vmem:[#allocation8 + $0x150] sm:$0xff]
    %v166 = vld [vmem:[#allocation8 + $0x158] sm:$0xff]
    %v167 = vld [vmem:[#allocation8 + $0x160] sm:$0xff]
    %v168 = vld [vmem:[#allocation8 + $0x168] sm:$0xff]
    %v169 = vld [vmem:[#allocation8 + $0x170] sm:$0xff]
    %v170 = vld [vmem:[#allocation8 + $0x178] sm:$0xff]
    %v171 = vld [vmem:[#allocation8 + $0x180] sm:$0xff]
    %v172 = vld [vmem:[#allocation8 + $0x188] sm:$0xff]
    %v173 = vld [vmem:[#allocation8 + $0x190] sm:$0xff]
    %v174 = vld [vmem:[#allocation8 + $0x198] sm:$0xff]
    %v175 = vld [vmem:[#allocation8 + $0x1a0] sm:$0xff]
    %v176 = vld [vmem:[#allocation8 + $0x1a8] sm:$0xff]
    %v177 = vld [vmem:[#allocation8 + $0x1b0] sm:$0xff]
    %v178 = vld [vmem:[#allocation8 + $0x1b8] sm:$0xff]
    %v179 = vld [vmem:[#allocation8 + $0x1c0] sm:$0xff]
    %v180 = vld [vmem:[#allocation8 + $0x1c8] sm:$0xff]
    %v181 = vld [vmem:[#allocation8 + $0x1d0] sm:$0xff]
    %v182 = vld [vmem:[#allocation8 + $0x1d8] sm:$0xff]
    %v183 = vld [vmem:[#allocation8 + $0x1e0] sm:$0xff]
    %v184 = vld [vmem:[#allocation8 + $0x1e8] sm:$0xff]
    %v185 = vld [vmem:[#allocation8 + $0x1f0] sm:$0xff]
    %v186 = vld [vmem:[#allocation8 + $0x1f8] sm:$0xff]
    %v187 = vld [vmem:[#allocation11] sm:$0xf]
    %v189 = vperm.slane %v187, 0
    %v190 = vperm.slane %v187, 1
    %v191 = vperm.slane %v187, 2
    %v192 = vperm.slane %v187, 3
    %197 = vmatpush.msra.mxu0 %v183
    %198 = vmatpush.msra.mxu0 %v179
    %199 = vmatpush.msra.mxu0 %v175
    %200 = vmatpush.msra.mxu0 %v171
    %201 = vmatpush.msra.mxu0 %v167
    %202 = vmatpush.msra.mxu0 %v163
    %203 = vmatpush.msra.mxu0 %v159
    %204 = vmatpush.msra.mxu0 %v155
    %205 = vmatpush.msra.mxu0 %v151
    %206 = vmatpush.msra.mxu0 %v147
    %207 = vmatpush.msra.mxu0 %v143
    %208 = vmatpush.msra.mxu0 %v139
    %209 = vmatpush.msra.mxu0 %v135
    %210 = vmatpush.msra.mxu0 %v131
    %211 = vmatpush.msra.mxu0 %v127
    %212 = vmatpush.msra.mxu0 %v123
    %213 = vmatmul.f32.gmra.mxu0 %v115
    %v214 = vpop.f32.mrf.mxu0
    %v215 = vadd.f32 %v189, %v214
    %216 = vmatmul.f32.gmra.mxu0 %v116
    %v217 = vpop.f32.mrf.mxu0
    %v218 = vadd.f32 %v189, %v217
    %219 = vmatmul.f32.gmra.mxu0 %v117
    %v220 = vpop.f32.mrf.mxu0
    %v221 = vadd.f32 %v189, %v220
    %222 = vmatmul.f32.gmra.mxu0 %v118
    %v223 = vpop.f32.mrf.mxu0
    %v224 = vadd.f32 %v189, %v223
    %225 = vmatmul.f32.gmra.mxu0 %v119
    %v226 = vpop.f32.mrf.mxu0
    %v227 = vadd.f32 %v189, %v226
    %228 = vmatmul.f32.gmra.mxu0 %v120
    %v229 = vpop.f32.mrf.mxu0
    %v230 = vadd.f32 %v189, %v229
    %231 = vmatmul.f32.gmra.mxu0 %v121
    %v232 = vpop.f32.mrf.mxu0
    %v233 = vadd.f32 %v189, %v232
    %234 = vmatmul.f32.gmra.mxu0 %v122
    %v235 = vpop.f32.mrf.mxu0
    %v236 = vadd.f32 %v189, %v235
    %237 = vdwg.mxu0
    %238 = vmatpush.msra.mxu0 %v184
    %239 = vmatpush.msra.mxu0 %v180
    %240 = vmatpush.msra.mxu0 %v176
    %241 = vmatpush.msra.mxu0 %v172
    %242 = vmatpush.msra.mxu0 %v168
    %243 = vmatpush.msra.mxu0 %v164
    %244 = vmatpush.msra.mxu0 %v160
    %245 = vmatpush.msra.mxu0 %v156
    %246 = vmatpush.msra.mxu0 %v152
    %247 = vmatpush.msra.mxu0 %v148
    %248 = vmatpush.msra.mxu0 %v144
    %249 = vmatpush.msra.mxu0 %v140
    %250 = vmatpush.msra.mxu0 %v136
    %251 = vmatpush.msra.mxu0 %v132
    %252 = vmatpush.msra.mxu0 %v128
    %253 = vmatpush.msra.mxu0 %v124
    %254 = vmatmul.f32.gmra.mxu0 %v115
    %v255 = vpop.f32.mrf.mxu0
    %v256 = vadd.f32 %v190, %v255
    %257 = vmatmul.f32.gmra.mxu0 %v116
    %v258 = vpop.f32.mrf.mxu0
    %v259 = vadd.f32 %v190, %v258
    %260 = vmatmul.f32.gmra.mxu0 %v117
    %v261 = vpop.f32.mrf.mxu0
    %v262 = vadd.f32 %v190, %v261
    %263 = vmatmul.f32.gmra.mxu0 %v118
    %v264 = vpop.f32.mrf.mxu0
    %v265 = vadd.f32 %v190, %v264
    %266 = vmatmul.f32.gmra.mxu0 %v119
    %v267 = vpop.f32.mrf.mxu0
    %v268 = vadd.f32 %v190, %v267
    %269 = vmatmul.f32.gmra.mxu0 %v120
    %v270 = vpop.f32.mrf.mxu0
    %v271 = vadd.f32 %v190, %v270
    %272 = vmatmul.f32.gmra.mxu0 %v121
    %v273 = vpop.f32.mrf.mxu0
    %v274 = vadd.f32 %v190, %v273
    %275 = vmatmul.f32.gmra.mxu0 %v122
    %v276 = vpop.f32.mrf.mxu0
    %v277 = vadd.f32 %v190, %v276
    %278 = vdwg.mxu0
    %279 = vmatpush.msra.mxu0 %v185
    %280 = vmatpush.msra.mxu0 %v181
    %281 = vmatpush.msra.mxu0 %v177
    %282 = vmatpush.msra.mxu0 %v173
    %283 = vmatpush.msra.mxu0 %v169
    %284 = vmatpush.msra.mxu0 %v165
    %285 = vmatpush.msra.mxu0 %v161
    %286 = vmatpush.msra.mxu0 %v157
    %287 = vmatpush.msra.mxu0 %v153
    %288 = vmatpush.msra.mxu0 %v149
    %289 = vmatpush.msra.mxu0 %v145
    %290 = vmatpush.msra.mxu0 %v141
    %291 = vmatpush.msra.mxu0 %v137
    %292 = vmatpush.msra.mxu0 %v133
    %293 = vmatpush.msra.mxu0 %v129
    %294 = vmatpush.msra.mxu0 %v125
    %295 = vmatmul.f32.gmra.mxu0 %v115
    %v296 = vpop.f32.mrf.mxu0
    %v297 = vadd.f32 %v191, %v296
    %298 = vmatmul.f32.gmra.mxu0 %v116
    %v299 = vpop.f32.mrf.mxu0
    %v300 = vadd.f32 %v191, %v299
    %301 = vmatmul.f32.gmra.mxu0 %v117
    %v302 = vpop.f32.mrf.mxu0
    %v303 = vadd.f32 %v191, %v302
    %304 = vmatmul.f32.gmra.mxu0 %v118
    %v305 = vpop.f32.mrf.mxu0
    %v306 = vadd.f32 %v191, %v305
    %307 = vmatmul.f32.gmra.mxu0 %v119
    %v308 = vpop.f32.mrf.mxu0
    %v309 = vadd.f32 %v191, %v308
    %310 = vmatmul.f32.gmra.mxu0 %v120
    %v311 = vpop.f32.mrf.mxu0
    %v312 = vadd.f32 %v191, %v311
    %313 = vmatmul.f32.gmra.mxu0 %v121
    %v314 = vpop.f32.mrf.mxu0
    %v315 = vadd.f32 %v191, %v314
    %316 = vmatmul.f32.gmra.mxu0 %v122
    %v317 = vpop.f32.mrf.mxu0
    %v318 = vadd.f32 %v191, %v317
    %319 = vdwg.mxu0
    %320 = vmatpush.msra.mxu0 %v186
    %321 = vmatpush.msra.mxu0 %v182
    %322 = vmatpush.msra.mxu0 %v178
    %323 = vmatpush.msra.mxu0 %v174
    %324 = vmatpush.msra.mxu0 %v170
    %325 = vmatpush.msra.mxu0 %v166
    %326 = vmatpush.msra.mxu0 %v162
    %327 = vmatpush.msra.mxu0 %v158
    %328 = vmatpush.msra.mxu0 %v154
    %329 = vmatpush.msra.mxu0 %v150
    %330 = vmatpush.msra.mxu0 %v146
    %331 = vmatpush.msra.mxu0 %v142
    %332 = vmatpush.msra.mxu0 %v138
    %333 = vmatpush.msra.mxu0 %v134
    %334 = vmatpush.msra.mxu0 %v130
    %335 = vmatpush.msra.mxu0 %v126
    %336 = vmatmul.f32.gmra.mxu0 %v115
    %v337 = vpop.f32.mrf.mxu0
    %v338 = vadd.f32 %v192, %v337
    %339 = vmatmul.f32.gmra.mxu0 %v116
    %v340 = vpop.f32.mrf.mxu0
    %v341 = vadd.f32 %v192, %v340
    %342 = vmatmul.f32.gmra.mxu0 %v117
    %v343 = vpop.f32.mrf.mxu0
    %v344 = vadd.f32 %v192, %v343
    %345 = vmatmul.f32.gmra.mxu0 %v118
    %v346 = vpop.f32.mrf.mxu0
    %v347 = vadd.f32 %v192, %v346
    %348 = vmatmul.f32.gmra.mxu0 %v119
    %v349 = vpop.f32.mrf.mxu0
    %v350 = vadd.f32 %v192, %v349
    %351 = vmatmul.f32.gmra.mxu0 %v120
    %v352 = vpop.f32.mrf.mxu0
    %v353 = vadd.f32 %v192, %v352
    %354 = vmatmul.f32.gmra.mxu0 %v121
    %v355 = vpop.f32.mrf.mxu0
    %v356 = vadd.f32 %v192, %v355
    %357 = vmatmul.f32.gmra.mxu0 %v122
    %v358 = vpop.f32.mrf.mxu0
    %v359 = vadd.f32 %v192, %v358
    %360 = vdwg.mxu0
    %361 = vst [vmem:[#allocation4] sm:$0xff] %v215
    %362 = vst [vmem:[#allocation4 + $0x8] sm:$0xff] %v256
    %363 = vst [vmem:[#allocation4 + $0x10] sm:$0xff] %v297
    %364 = vst [vmem:[#allocation4 + $0x18] sm:$0xff] %v338
    %365 = vst [vmem:[#allocation4 + $0x20] sm:$0xff] %v218
    %366 = vst [vmem:[#allocation4 + $0x28] sm:$0xff] %v259
    %367 = vst [vmem:[#allocation4 + $0x30] sm:$0xff] %v300
    %368 = vst [vmem:[#allocation4 + $0x38] sm:$0xff] %v341
    %369 = vst [vmem:[#allocation4 + $0x40] sm:$0xff] %v221
    %370 = vst [vmem:[#allocation4 + $0x48] sm:$0xff] %v262
    %371 = vst [vmem:[#allocation4 + $0x50] sm:$0xff] %v303
    %372 = vst [vmem:[#allocation4 + $0x58] sm:$0xff] %v344
    %373 = vst [vmem:[#allocation4 + $0x60] sm:$0xff] %v224
    %374 = vst [vmem:[#allocation4 + $0x68] sm:$0xff] %v265
    %375 = vst [vmem:[#allocation4 + $0x70] sm:$0xff] %v306
    %376 = vst [vmem:[#allocation4 + $0x78] sm:$0xff] %v347
    %377 = vst [vmem:[#allocation4 + $0x80] sm:$0xff] %v227
    %378 = vst [vmem:[#allocation4 + $0x88] sm:$0xff] %v268
    %379 = vst [vmem:[#allocation4 + $0x90] sm:$0xff] %v309
    %380 = vst [vmem:[#allocation4 + $0x98] sm:$0xff] %v350
    %381 = vst [vmem:[#allocation4 + $0xa0] sm:$0xff] %v230
    %382 = vst [vmem:[#allocation4 + $0xa8] sm:$0xff] %v271
    %383 = vst [vmem:[#allocation4 + $0xb0] sm:$0xff] %v312
    %384 = vst [vmem:[#allocation4 + $0xb8] sm:$0xff] %v353
    %385 = vst [vmem:[#allocation4 + $0xc0] sm:$0xff] %v233
    %386 = vst [vmem:[#allocation4 + $0xc8] sm:$0xff] %v274
    %387 = vst [vmem:[#allocation4 + $0xd0] sm:$0xff] %v315
    %388 = vst [vmem:[#allocation4 + $0xd8] sm:$0xff] %v356
    %389 = vst [vmem:[#allocation4 + $0xe0] sm:$0xff] %v236
    %390 = vst [vmem:[#allocation4 + $0xe8] sm:$0xff] %v277
    %391 = vst [vmem:[#allocation4 + $0xf0] sm:$0xff] %v318
    %392 = vst [vmem:[#allocation4 + $0xf8] sm:$0xff] %v359
    %p393 = scmp.eq.s32.totalorder 0, 0
    // Predicated region
    $region50: #{tpu_custom_call.1} parent=1 // pred_check
      %p394 = pneg %p393
    $region51: #{tpu_custom_call.1} parent=1 // pred_check_branch
      %396 = sbr.rel (%p394) target = $region53
    $region52: #{tpu_custom_call.1} parent=1 // pred_region
      %v397 = vld [vmem:[#allocation13] sm:$0xff]
      %v398 = vld [vmem:[#allocation10] sm:$0xff]
      %v399 = vld [vmem:[#allocation10 + $0x8] sm:$0xff]
      %v400 = vld [vmem:[#allocation10 + $0x10] sm:$0xff]
      %v401 = vld [vmem:[#allocation10 + $0x18] sm:$0xff]
      %v402 = vld [vmem:[#allocation10 + $0x20] sm:$0xff]
      %v403 = vld [vmem:[#allocation10 + $0x28] sm:$0xff]
      %v404 = vld [vmem:[#allocation10 + $0x30] sm:$0xff]
      %v405 = vld [vmem:[#allocation10 + $0x38] sm:$0xff]
      %v406 = vld [vmem:[#allocation10 + $0x40] sm:$0xff]
      %v407 = vld [vmem:[#allocation10 + $0x48] sm:$0xff]
      %v408 = vld [vmem:[#allocation10 + $0x50] sm:$0xff]
      %v409 = vld [vmem:[#allocation10 + $0x58] sm:$0xff]
      %v410 = vld [vmem:[#allocation10 + $0x60] sm:$0xff]
      %v411 = vld [vmem:[#allocation10 + $0x68] sm:$0xff]
      %v412 = vld [vmem:[#allocation10 + $0x70] sm:$0xff]
      %v413 = vld [vmem:[#allocation10 + $0x78] sm:$0xff]
      %v414 = vld [vmem:[#allocation10 + $0x80] sm:$0xff]
      %v415 = vld [vmem:[#allocation10 + $0x88] sm:$0xff]
      %v416 = vld [vmem:[#allocation10 + $0x90] sm:$0xff]
      %v417 = vld [vmem:[#allocation10 + $0x98] sm:$0xff]
      %v418 = vld [vmem:[#allocation10 + $0xa0] sm:$0xff]
      %v419 = vld [vmem:[#allocation10 + $0xa8] sm:$0xff]
      %v420 = vld [vmem:[#allocation10 + $0xb0] sm:$0xff]
      %v421 = vld [vmem:[#allocation10 + $0xb8] sm:$0xff]
      %v422 = vld [vmem:[#allocation10 + $0xc0] sm:$0xff]
      %v423 = vld [vmem:[#allocation10 + $0xc8] sm:$0xff]
      %v424 = vld [vmem:[#allocation10 + $0xd0] sm:$0xff]
      %v425 = vld [vmem:[#allocation10 + $0xd8] sm:$0xff]
      %v426 = vld [vmem:[#allocation10 + $0xe0] sm:$0xff]
      %v427 = vld [vmem:[#allocation10 + $0xe8] sm:$0xff]
      %v428 = vld [vmem:[#allocation10 + $0xf0] sm:$0xff]
      %v429 = vld [vmem:[#allocation10 + $0xf8] sm:$0xff]
      %v430 = vld [vmem:[#allocation10 + $0x100] sm:$0xff]
      %v431 = vld [vmem:[#allocation10 + $0x108] sm:$0xff]
      %v432 = vld [vmem:[#allocation10 + $0x110] sm:$0xff]
      %v433 = vld [vmem:[#allocation10 + $0x118] sm:$0xff]
      %v434 = vld [vmem:[#allocation10 + $0x120] sm:$0xff]
      %v435 = vld [vmem:[#allocation10 + $0x128] sm:$0xff]
      %v436 = vld [vmem:[#allocation10 + $0x130] sm:$0xff]
      %v437 = vld [vmem:[#allocation10 + $0x138] sm:$0xff]
      %v438 = vld [vmem:[#allocation10 + $0x140] sm:$0xff]
      %v439 = vld [vmem:[#allocation10 + $0x148] sm:$0xff]
      %v440 = vld [vmem:[#allocation10 + $0x150] sm:$0xff]
      %v441 = vld [vmem:[#allocation10 + $0x158] sm:$0xff]
      %v442 = vld [vmem:[#allocation10 + $0x160] sm:$0xff]
      %v443 = vld [vmem:[#allocation10 + $0x168] sm:$0xff]
      %v444 = vld [vmem:[#allocation10 + $0x170] sm:$0xff]
      %v445 = vld [vmem:[#allocation10 + $0x178] sm:$0xff]
      %v446 = vld [vmem:[#allocation10 + $0x180] sm:$0xff]
      %v447 = vld [vmem:[#allocation10 + $0x188] sm:$0xff]
      %v448 = vld [vmem:[#allocation10 + $0x190] sm:$0xff]
      %v449 = vld [vmem:[#allocation10 + $0x198] sm:$0xff]
      %v450 = vld [vmem:[#allocation10 + $0x1a0] sm:$0xff]
      %v451 = vld [vmem:[#allocation10 + $0x1a8] sm:$0xff]
      %v452 = vld [vmem:[#allocation10 + $0x1b0] sm:$0xff]
      %v453 = vld [vmem:[#allocation10 + $0x1b8] sm:$0xff]
      %v454 = vld [vmem:[#allocation10 + $0x1c0] sm:$0xff]
      %v455 = vld [vmem:[#allocation10 + $0x1c8] sm:$0xff]
      %v456 = vld [vmem:[#allocation10 + $0x1d0] sm:$0xff]
      %v457 = vld [vmem:[#allocation10 + $0x1d8] sm:$0xff]
      %v458 = vld [vmem:[#allocation10 + $0x1e0] sm:$0xff]
      %v459 = vld [vmem:[#allocation10 + $0x1e8] sm:$0xff]
      %v460 = vld [vmem:[#allocation10 + $0x1f0] sm:$0xff]
      %v461 = vld [vmem:[#allocation10 + $0x1f8] sm:$0xff]
      %462 = vmatpush.msra.mxu0 %v458
      %463 = vmatpush.msra.mxu0 %v454
      %464 = vmatpush.msra.mxu0 %v450
      %465 = vmatpush.msra.mxu0 %v446
      %466 = vmatpush.msra.mxu0 %v442
      %467 = vmatpush.msra.mxu0 %v438
      %468 = vmatpush.msra.mxu0 %v434
      %469 = vmatpush.msra.mxu0 %v430
      %470 = vmatpush.msra.mxu0 %v426
      %471 = vmatpush.msra.mxu0 %v422
      %472 = vmatpush.msra.mxu0 %v418
      %473 = vmatpush.msra.mxu0 %v414
      %474 = vmatpush.msra.mxu0 %v410
      %475 = vmatpush.msra.mxu0 %v406
      %476 = vmatpush.msra.mxu0 %v402
      %477 = vmatpush.msra.mxu0 %v398
      %478 = vmatmul.f32.gmra.mxu0 %v397
      %v479 = vpop.f32.mrf.mxu0
      %v480 = vadd.f32 0.0, %v479
      %481 = vdwg.mxu0
      %482 = vmatpush.msra.mxu0 %v459
      %483 = vmatpush.msra.mxu0 %v455
      %484 = vmatpush.msra.mxu0 %v451
      %485 = vmatpush.msra.mxu0 %v447
      %486 = vmatpush.msra.mxu0 %v443
      %487 = vmatpush.msra.mxu0 %v439
      %488 = vmatpush.msra.mxu0 %v435
      %489 = vmatpush.msra.mxu0 %v431
      %490 = vmatpush.msra.mxu0 %v427
      %491 = vmatpush.msra.mxu0 %v423
      %492 = vmatpush.msra.mxu0 %v419
      %493 = vmatpush.msra.mxu0 %v415
      %494 = vmatpush.msra.mxu0 %v411
      %495 = vmatpush.msra.mxu0 %v407
      %496 = vmatpush.msra.mxu0 %v403
      %497 = vmatpush.msra.mxu0 %v399
      %498 = vmatmul.f32.gmra.mxu0 %v397
      %v499 = vpop.f32.mrf.mxu0
      %v500 = vadd.f32 0.0, %v499
      %501 = vdwg.mxu0
      %502 = vmatpush.msra.mxu0 %v460
      %503 = vmatpush.msra.mxu0 %v456
      %504 = vmatpush.msra.mxu0 %v452
      %505 = vmatpush.msra.mxu0 %v448
      %506 = vmatpush.msra.mxu0 %v444
      %507 = vmatpush.msra.mxu0 %v440
      %508 = vmatpush.msra.mxu0 %v436
      %509 = vmatpush.msra.mxu0 %v432
      %510 = vmatpush.msra.mxu0 %v428
      %511 = vmatpush.msra.mxu0 %v424
      %512 = vmatpush.msra.mxu0 %v420
      %513 = vmatpush.msra.mxu0 %v416
      %514 = vmatpush.msra.mxu0 %v412
      %515 = vmatpush.msra.mxu0 %v408
      %516 = vmatpush.msra.mxu0 %v404
      %517 = vmatpush.msra.mxu0 %v400
      %518 = vmatmul.f32.gmra.mxu0 %v397
      %v519 = vpop.f32.mrf.mxu0
      %v520 = vadd.f32 0.0, %v519
      %521 = vdwg.mxu0
      %522 = vmatpush.msra.mxu0 %v461
      %523 = vmatpush.msra.mxu0 %v457
      %524 = vmatpush.msra.mxu0 %v453
      %525 = vmatpush.msra.mxu0 %v449
      %526 = vmatpush.msra.mxu0 %v445
      %527 = vmatpush.msra.mxu0 %v441
      %528 = vmatpush.msra.mxu0 %v437
      %529 = vmatpush.msra.mxu0 %v433
      %530 = vmatpush.msra.mxu0 %v429
      %531 = vmatpush.msra.mxu0 %v425
      %532 = vmatpush.msra.mxu0 %v421
      %533 = vmatpush.msra.mxu0 %v417
      %534 = vmatpush.msra.mxu0 %v413
      %535 = vmatpush.msra.mxu0 %v409
      %536 = vmatpush.msra.mxu0 %v405
      %537 = vmatpush.msra.mxu0 %v401
      %538 = vmatmul.f32.gmra.mxu0 %v397
      %v539 = vpop.f32.mrf.mxu0
      %v540 = vadd.f32 0.0, %v539
      %541 = vdwg.mxu0
      %542 = vst [vmem:[#allocation2] sm:$0xff] %v480
      %543 = vst [vmem:[#allocation2 + $0x8] sm:$0xff] %v500
      %544 = vst [vmem:[#allocation2 + $0x10] sm:$0xff] %v520
      %545 = vst [vmem:[#allocation2 + $0x18] sm:$0xff] %v540
      %v546 = vperm.slane %v540, 0
      %547 = vst [vmem:[#allocation2 + $0x18] sm:$0xff] %v546
      %v548 = vld [vmem:[#allocation14] sm:$0xff]
      %549 = vst [vmem:[#allocation3] sm:$0xff] %v548
    $region53: #{tpu_custom_call.1} parent=1 // pred_fallthru
      _
    %v550 = vld [vmem:[#allocation10] sm:$0xff]
    %v551 = vld [vmem:[#allocation10 + $0x8] sm:$0xff]
    %v552 = vld [vmem:[#allocation10 + $0x10] sm:$0xff]
    %v553 = vld [vmem:[#allocation10 + $0x18] sm:$0xff]
    %v554 = vld [vmem:[#allocation10 + $0x20] sm:$0xff]
    %v555 = vld [vmem:[#allocation10 + $0x28] sm:$0xff]
    %v556 = vld [vmem:[#allocation10 + $0x30] sm:$0xff]
    %v557 = vld [vmem:[#allocation10 + $0x38] sm:$0xff]
    %v558 = vld [vmem:[#allocation10 + $0x40] sm:$0xff]
    %v559 = vld [vmem:[#allocation10 + $0x48] sm:$0xff]
    %v560 = vld [vmem:[#allocation10 + $0x50] sm:$0xff]
    %v561 = vld [vmem:[#allocation10 + $0x58] sm:$0xff]
    %v562 = vld [vmem:[#allocation10 + $0x60] sm:$0xff]
    %v563 = vld [vmem:[#allocation10 + $0x68] sm:$0xff]
    %v564 = vld [vmem:[#allocation10 + $0x70] sm:$0xff]
    %v565 = vld [vmem:[#allocation10 + $0x78] sm:$0xff]
    %v566 = vld [vmem:[#allocation10 + $0x80] sm:$0xff]
    %v567 = vld [vmem:[#allocation10 + $0x88] sm:$0xff]
    %v568 = vld [vmem:[#allocation10 + $0x90] sm:$0xff]
    %v569 = vld [vmem:[#allocation10 + $0x98] sm:$0xff]
    %v570 = vld [vmem:[#allocation10 + $0xa0] sm:$0xff]
    %v571 = vld [vmem:[#allocation10 + $0xa8] sm:$0xff]
    %v572 = vld [vmem:[#allocation10 + $0xb0] sm:$0xff]
    %v573 = vld [vmem:[#allocation10 + $0xb8] sm:$0xff]
    %v574 = vld [vmem:[#allocation10 + $0xc0] sm:$0xff]
    %v575 = vld [vmem:[#allocation10 + $0xc8] sm:$0xff]
    %v576 = vld [vmem:[#allocation10 + $0xd0] sm:$0xff]
    %v577 = vld [vmem:[#allocation10 + $0xd8] sm:$0xff]
    %v578 = vld [vmem:[#allocation10 + $0xe0] sm:$0xff]
    %v579 = vld [vmem:[#allocation10 + $0xe8] sm:$0xff]
    %v580 = vld [vmem:[#allocation10 + $0xf0] sm:$0xff]
    %v581 = vld [vmem:[#allocation10 + $0xf8] sm:$0xff]
    %v582 = vld [vmem:[#allocation10 + $0x100] sm:$0xff]
    %v583 = vld [vmem:[#allocation10 + $0x108] sm:$0xff]
    %v584 = vld [vmem:[#allocation10 + $0x110] sm:$0xff]
    %v585 = vld [vmem:[#allocation10 + $0x118] sm:$0xff]
    %v586 = vld [vmem:[#allocation10 + $0x120] sm:$0xff]
    %v587 = vld [vmem:[#allocation10 + $0x128] sm:$0xff]
    %v588 = vld [vmem:[#allocation10 + $0x130] sm:$0xff]
    %v589 = vld [vmem:[#allocation10 + $0x138] sm:$0xff]
    %v590 = vld [vmem:[#allocation10 + $0x140] sm:$0xff]
    %v591 = vld [vmem:[#allocation10 + $0x148] sm:$0xff]
    %v592 = vld [vmem:[#allocation10 + $0x150] sm:$0xff]
    %v593 = vld [vmem:[#allocation10 + $0x158] sm:$0xff]
    %v594 = vld [vmem:[#allocation10 + $0x160] sm:$0xff]
    %v595 = vld [vmem:[#allocation10 + $0x168] sm:$0xff]
    %v596 = vld [vmem:[#allocation10 + $0x170] sm:$0xff]
    %v597 = vld [vmem:[#allocation10 + $0x178] sm:$0xff]
    %v598 = vld [vmem:[#allocation10 + $0x180] sm:$0xff]
    %v599 = vld [vmem:[#allocation10 + $0x188] sm:$0xff]
    %v600 = vld [vmem:[#allocation10 + $0x190] sm:$0xff]
    %v601 = vld [vmem:[#allocation10 + $0x198] sm:$0xff]
    %v602 = vld [vmem:[#allocation10 + $0x1a0] sm:$0xff]
    %v603 = vld [vmem:[#allocation10 + $0x1a8] sm:$0xff]
    %v604 = vld [vmem:[#allocation10 + $0x1b0] sm:$0xff]
    %v605 = vld [vmem:[#allocation10 + $0x1b8] sm:$0xff]
    %v606 = vld [vmem:[#allocation10 + $0x1c0] sm:$0xff]
    %v607 = vld [vmem:[#allocation10 + $0x1c8] sm:$0xff]
    %v608 = vld [vmem:[#allocation10 + $0x1d0] sm:$0xff]
    %v609 = vld [vmem:[#allocation10 + $0x1d8] sm:$0xff]
    %v610 = vld [vmem:[#allocation10 + $0x1e0] sm:$0xff]
    %v611 = vld [vmem:[#allocation10 + $0x1e8] sm:$0xff]
    %v612 = vld [vmem:[#allocation10 + $0x1f0] sm:$0xff]
    %v613 = vld [vmem:[#allocation10 + $0x1f8] sm:$0xff]
    %v614 = vld [vmem:[#allocation2] sm:$0xff]
    %v615 = vld [vmem:[#allocation2 + $0x8] sm:$0xff]
    %v616 = vld [vmem:[#allocation2 + $0x10] sm:$0xff]
    %v617 = vld [vmem:[#allocation2 + $0x18] sm:$0xff]
    %v618 = vld [vmem:[#allocation3] sm:$0xff]
    %v619 = vld [vmem:[#allocation4] sm:$0xff]
    %v620 = vld [vmem:[#allocation4 + $0x8] sm:$0xff]
    %v621 = vld [vmem:[#allocation4 + $0x10] sm:$0xff]
    %v622 = vld [vmem:[#allocation4 + $0x18] sm:$0xff]
    %v623 = vadd.f32 %v619, %v614
    %v624 = vadd.f32 %v620, %v615
    %v625 = vadd.f32 %v621, %v616
    %v626 = vadd.f32 %v622, %v617
    %v627 = vsub.f32 0.0, %v623
    %v628 = vmul.f32 %v627, 1.442695
    %v629 = vpow.pop %v628
    %v630 = vadd.f32 %v629, 1.0
    %v631 = vrcp.pop %v630
    %v632 = vmul.f32 %v630, %v631
    %v633 = vsub.f32 1.0, %v632
    %v634 = vmul.f32 %v631, %v633
    %v635 = vadd.f32 %v631, %v634
    %vm636 = vweird.f32 %v630
    %vm637 = vweird.f32 %v631
    %vm638 = vmor %vm636, %vm637
    %v639 = vsel %vm638, %v631, %v635
    %v640 = vand.u32 2147483647, %v630
    %vm641 = vcmp.eq.f32.partialorder %v640, 8.507059e+37
    %v642 = vand.u32 %v630, 2147483648
    %v643 = vor.u32 1.1754944e-38, %v642
    %v644 = vsel %vm641, %v643, %v639
    %v645 = vmul.f32 1.0, %v644
    %v646 = vsub.f32 0.0, %v624
    %v647 = vmul.f32 %v646, 1.442695
    %v648 = vpow.pop %v647
    %v649 = vadd.f32 %v648, 1.0
    %v650 = vrcp.pop %v649
    %v651 = vmul.f32 %v649, %v650
    %v652 = vsub.f32 1.0, %v651
    %v653 = vmul.f32 %v650, %v652
    %v654 = vadd.f32 %v650, %v653
    %vm655 = vweird.f32 %v649
    %vm656 = vweird.f32 %v650
    %vm657 = vmor %vm655, %vm656
    %v658 = vsel %vm657, %v650, %v654
    %v659 = vand.u32 2147483647, %v649
    %vm660 = vcmp.eq.f32.partialorder %v659, 8.507059e+37
    %v661 = vand.u32 %v649, 2147483648
    %v662 = vor.u32 1.1754944e-38, %v661
    %v663 = vsel %vm660, %v662, %v658
    %v664 = vmul.f32 1.0, %v663
    %v665 = vsub.f32 0.0, %v625
    %v666 = vmul.f32 %v665, 1.442695
    %v667 = vpow.pop %v666
    %v668 = vadd.f32 %v667, 1.0
    %v669 = vrcp.pop %v668
    %v670 = vmul.f32 %v668, %v669
    %v671 = vsub.f32 1.0, %v670
    %v672 = vmul.f32 %v669, %v671
    %v673 = vadd.f32 %v669, %v672
    %vm674 = vweird.f32 %v668
    %vm675 = vweird.f32 %v669
    %vm676 = vmor %vm674, %vm675
    %v677 = vsel %vm676, %v669, %v673
    %v678 = vand.u32 2147483647, %v668
    %vm679 = vcmp.eq.f32.partialorder %v678, 8.507059e+37
    %v680 = vand.u32 %v668, 2147483648
    %v681 = vor.u32 1.1754944e-38, %v680
    %v682 = vsel %vm679, %v681, %v677
    %v683 = vmul.f32 1.0, %v682
    %v684 = vtanh.pop %v626
    %v685 = vmul.f32 %v645, %v618
    %v686 = vmul.f32 %v664, %v684
    %v687 = vadd.f32 %v685, %v686
    %v688 = vtanh.pop %v687
    %v689 = vmul.f32 %v683, %v688
    %690 = vst [vmem:[#allocation16] sm:$0xff] %v689
    %691 = vmatpush.msra.mxu0 %v610
    %692 = vmatpush.msra.mxu0 %v606
    %693 = vmatpush.msra.mxu0 %v602
    %694 = vmatpush.msra.mxu0 %v598
    %695 = vmatpush.msra.mxu0 %v594
    %696 = vmatpush.msra.mxu0 %v590
    %697 = vmatpush.msra.mxu0 %v586
    %698 = vmatpush.msra.mxu0 %v582
    %699 = vmatpush.msra.mxu0 %v578
    %700 = vmatpush.msra.mxu0 %v574
    %701 = vmatpush.msra.mxu0 %v570
    %702 = vmatpush.msra.mxu0 %v566
    %703 = vmatpush.msra.mxu0 %v562
    %704 = vmatpush.msra.mxu0 %v558
    %705 = vmatpush.msra.mxu0 %v554
    %706 = vmatpush.msra.mxu0 %v550
    %707 = vmatmul.f32.gmra.mxu0 %v689
    %v708 = vpop.f32.mrf.mxu0
    %v709 = vadd.f32 0.0, %v708
    %710 = vdwg.mxu0
    %711 = vmatpush.msra.mxu0 %v611
    %712 = vmatpush.msra.mxu0 %v607
    %713 = vmatpush.msra.mxu0 %v603
    %714 = vmatpush.msra.mxu0 %v599
    %715 = vmatpush.msra.mxu0 %v595
    %716 = vmatpush.msra.mxu0 %v591
    %717 = vmatpush.msra.mxu0 %v587
    %718 = vmatpush.msra.mxu0 %v583
    %719 = vmatpush.msra.mxu0 %v579
    %720 = vmatpush.msra.mxu0 %v575
    %721 = vmatpush.msra.mxu0 %v571
    %722 = vmatpush.msra.mxu0 %v567
    %723 = vmatpush.msra.mxu0 %v563
    %724 = vmatpush.msra.mxu0 %v559
    %725 = vmatpush.msra.mxu0 %v555
    %726 = vmatpush.msra.mxu0 %v551
    %727 = vmatmul.f32.gmra.mxu0 %v689
    %v728 = vpop.f32.mrf.mxu0
    %v729 = vadd.f32 0.0, %v728
    %730 = vdwg.mxu0
    %731 = vmatpush.msra.mxu0 %v612
    %732 = vmatpush.msra.mxu0 %v608
    %733 = vmatpush.msra.mxu0 %v604
    %734 = vmatpush.msra.mxu0 %v600
    %735 = vmatpush.msra.mxu0 %v596
    %736 = vmatpush.msra.mxu0 %v592
    %737 = vmatpush.msra.mxu0 %v588
    %738 = vmatpush.msra.mxu0 %v584
    %739 = vmatpush.msra.mxu0 %v580
    %740 = vmatpush.msra.mxu0 %v576
    %741 = vmatpush.msra.mxu0 %v572
    %742 = vmatpush.msra.mxu0 %v568
    %743 = vmatpush.msra.mxu0 %v564
    %744 = vmatpush.msra.mxu0 %v560
    %745 = vmatpush.msra.mxu0 %v556
    %746 = vmatpush.msra.mxu0 %v552
    %747 = vmatmul.f32.gmra.mxu0 %v689
    %v748 = vpop.f32.mrf.mxu0
    %v749 = vadd.f32 0.0, %v748
    %750 = vdwg.mxu0
    %751 = vmatpush.msra.mxu0 %v613
    %752 = vmatpush.msra.mxu0 %v609
    %753 = vmatpush.msra.mxu0 %v605
    %754 = vmatpush.msra.mxu0 %v601
    %755 = vmatpush.msra.mxu0 %v597
    %756 = vmatpush.msra.mxu0 %v593
    %757 = vmatpush.msra.mxu0 %v589
    %758 = vmatpush.msra.mxu0 %v585
    %759 = vmatpush.msra.mxu0 %v581
    %760 = vmatpush.msra.mxu0 %v577
    %761 = vmatpush.msra.mxu0 %v573
    %762 = vmatpush.msra.mxu0 %v569
    %763 = vmatpush.msra.mxu0 %v565
    %764 = vmatpush.msra.mxu0 %v561
    %765 = vmatpush.msra.mxu0 %v557
    %766 = vmatpush.msra.mxu0 %v553
    %767 = vmatmul.f32.gmra.mxu0 %v689
    %v768 = vpop.f32.mrf.mxu0
    %v769 = vadd.f32 0.0, %v768
    %770 = vdwg.mxu0
    %s771 = scalar_lea.vmem [#allocation4], 32
    %v772 = vld [vmem:[%s771] sm:$0xff]
    %v773 = vld [vmem:[%s771 + $0x8] sm:$0xff]
    %v774 = vld [vmem:[%s771 + $0x10] sm:$0xff]
    %v775 = vld [vmem:[%s771 + $0x18] sm:$0xff]
    %v776 = vadd.f32 %v772, %v709
    %v777 = vadd.f32 %v773, %v729
    %v778 = vadd.f32 %v774, %v749
    %v779 = vadd.f32 %v775, %v769
    %v780 = vsub.f32 0.0, %v776
    %v781 = vmul.f32 %v780, 1.442695
    %v782 = vpow.pop %v781
    %v783 = vadd.f32 %v782, 1.0
    %v784 = vrcp.pop %v783
    %v785 = vmul.f32 %v783, %v784
    %v786 = vsub.f32 1.0, %v785
    %v787 = vmul.f32 %v784, %v786
    %v788 = vadd.f32 %v784, %v787
    %vm789 = vweird.f32 %v783
    %vm790 = vweird.f32 %v784
    %vm791 = vmor %vm789, %vm790
    %v792 = vsel %vm791, %v784, %v788
    %v793 = vand.u32 2147483647, %v783
    %vm794 = vcmp.eq.f32.partialorder %v793, 8.507059e+37
    %v795 = vand.u32 %v783, 2147483648
    %v796 = vor.u32 1.1754944e-38, %v795
    %v797 = vsel %vm794, %v796, %v792
    %v798 = vmul.f32 1.0, %v797
    %v799 = vsub.f32 0.0, %v777
    %v800 = vmul.f32 %v799, 1.442695
    %v801 = vpow.pop %v800
    %v802 = vadd.f32 %v801, 1.0
    %v803 = vrcp.pop %v802
    %v804 = vmul.f32 %v802, %v803
    %v805 = vsub.f32 1.0, %v804
    %v806 = vmul.f32 %v803, %v805
    %v807 = vadd.f32 %v803, %v806
    %vm808 = vweird.f32 %v802
    %vm809 = vweird.f32 %v803
    %vm810 = vmor %vm808, %vm809
    %v811 = vsel %vm810, %v803, %v807
    %v812 = vand.u32 2147483647, %v802
    %vm813 = vcmp.eq.f32.partialorder %v812, 8.507059e+37
    %v814 = vand.u32 %v802, 2147483648
    %v815 = vor.u32 1.1754944e-38, %v814
    %v816 = vsel %vm813, %v815, %v811
    %v817 = vmul.f32 1.0, %v816
    %v818 = vsub.f32 0.0, %v778
    %v819 = vmul.f32 %v818, 1.442695
    %v820 = vpow.pop %v819
    %v821 = vadd.f32 %v820, 1.0
    %v822 = vrcp.pop %v821
    %v823 = vmul.f32 %v821, %v822
    %v824 = vsub.f32 1.0, %v823
    %v825 = vmul.f32 %v822, %v824
    %v826 = vadd.f32 %v822, %v825
    %vm827 = vweird.f32 %v821
    %vm828 = vweird.f32 %v822
    %vm829 = vmor %vm827, %vm828
    %v830 = vsel %vm829, %v822, %v826
    %v831 = vand.u32 2147483647, %v821
    %vm832 = vcmp.eq.f32.partialorder %v831, 8.507059e+37
    %v833 = vand.u32 %v821, 2147483648
    %v834 = vor.u32 1.1754944e-38, %v833
    %v835 = vsel %vm832, %v834, %v830
    %v836 = vmul.f32 1.0, %v835
    %v837 = vtanh.pop %v779
    %v838 = vmul.f32 %v798, %v687
    %v839 = vmul.f32 %v817, %v837
    %v840 = vadd.f32 %v838, %v839
    %v841 = vtanh.pop %v840
    %v842 = vmul.f32 %v836, %v841
    %s843 = scalar_lea.vmem [#allocation16], 8
    %844 = vst [vmem:[%s843] sm:$0xff] %v842
    %845 = vmatpush.msra.mxu0 %v610
    %846 = vmatpush.msra.mxu0 %v606
    %847 = vmatpush.msra.mxu0 %v602
    %848 = vmatpush.msra.mxu0 %v598
    %849 = vmatpush.msra.mxu0 %v594
    %850 = vmatpush.msra.mxu0 %v590
    %851 = vmatpush.msra.mxu0 %v586
    %852 = vmatpush.msra.mxu0 %v582
    %853 = vmatpush.msra.mxu0 %v578
    %854 = vmatpush.msra.mxu0 %v574
    %855 = vmatpush.msra.mxu0 %v570
    %856 = vmatpush.msra.mxu0 %v566
    %857 = vmatpush.msra.mxu0 %v562
    %858 = vmatpush.msra.mxu0 %v558
    %859 = vmatpush.msra.mxu0 %v554
    %860 = vmatpush.msra.mxu0 %v550
    %861 = vmatmul.f32.gmra.mxu0 %v842
    %v862 = vpop.f32.mrf.mxu0
    %v863 = vadd.f32 0.0, %v862
    %864 = vdwg.mxu0
    %865 = vmatpush.msra.mxu0 %v611
    %866 = vmatpush.msra.mxu0 %v607
    %867 = vmatpush.msra.mxu0 %v603
    %868 = vmatpush.msra.mxu0 %v599
    %869 = vmatpush.msra.mxu0 %v595
    %870 = vmatpush.msra.mxu0 %v591
    %871 = vmatpush.msra.mxu0 %v587
    %872 = vmatpush.msra.mxu0 %v583
    %873 = vmatpush.msra.mxu0 %v579
    %874 = vmatpush.msra.mxu0 %v575
    %875 = vmatpush.msra.mxu0 %v571
    %876 = vmatpush.msra.mxu0 %v567
    %877 = vmatpush.msra.mxu0 %v563
    %878 = vmatpush.msra.mxu0 %v559
    %879 = vmatpush.msra.mxu0 %v555
    %880 = vmatpush.msra.mxu0 %v551
    %881 = vmatmul.f32.gmra.mxu0 %v842
    %v882 = vpop.f32.mrf.mxu0
    %v883 = vadd.f32 0.0, %v882
    %884 = vdwg.mxu0
    %885 = vmatpush.msra.mxu0 %v612
    %886 = vmatpush.msra.mxu0 %v608
    %887 = vmatpush.msra.mxu0 %v604
    %888 = vmatpush.msra.mxu0 %v600
    %889 = vmatpush.msra.mxu0 %v596
    %890 = vmatpush.msra.mxu0 %v592
    %891 = vmatpush.msra.mxu0 %v588
    %892 = vmatpush.msra.mxu0 %v584
    %893 = vmatpush.msra.mxu0 %v580
    %894 = vmatpush.msra.mxu0 %v576
    %895 = vmatpush.msra.mxu0 %v572
    %896 = vmatpush.msra.mxu0 %v568
    %897 = vmatpush.msra.mxu0 %v564
    %898 = vmatpush.msra.mxu0 %v560
    %899 = vmatpush.msra.mxu0 %v556
    %900 = vmatpush.msra.mxu0 %v552
    %901 = vmatmul.f32.gmra.mxu0 %v842
    %v902 = vpop.f32.mrf.mxu0
    %v903 = vadd.f32 0.0, %v902
    %904 = vdwg.mxu0
    %905 = vmatpush.msra.mxu0 %v613
    %906 = vmatpush.msra.mxu0 %v609
    %907 = vmatpush.msra.mxu0 %v605
    %908 = vmatpush.msra.mxu0 %v601
    %909 = vmatpush.msra.mxu0 %v597
    %910 = vmatpush.msra.mxu0 %v593
    %911 = vmatpush.msra.mxu0 %v589
    %912 = vmatpush.msra.mxu0 %v585
    %913 = vmatpush.msra.mxu0 %v581
    %914 = vmatpush.msra.mxu0 %v577
    %915 = vmatpush.msra.mxu0 %v573
    %916 = vmatpush.msra.mxu0 %v569
    %917 = vmatpush.msra.mxu0 %v565
    %918 = vmatpush.msra.mxu0 %v561
    %919 = vmatpush.msra.mxu0 %v557
    %920 = vmatpush.msra.mxu0 %v553
    %921 = vmatmul.f32.gmra.mxu0 %v842
    %v922 = vpop.f32.mrf.mxu0
    %v923 = vadd.f32 0.0, %v922
    %924 = vdwg.mxu0
    %s925 = scalar_lea.vmem [#allocation4], 64
    %v926 = vld [vmem:[%s925] sm:$0xff]
    %v927 = vld [vmem:[%s925 + $0x8] sm:$0xff]
    %v928 = vld [vmem:[%s925 + $0x10] sm:$0xff]
    %v929 = vld [vmem:[%s925 + $0x18] sm:$0xff]
    %v930 = vadd.f32 %v926, %v863
    %v931 = vadd.f32 %v927, %v883
    %v932 = vadd.f32 %v928, %v903
    %v933 = vadd.f32 %v929, %v923
    %v934 = vsub.f32 0.0, %v930
    %v935 = vmul.f32 %v934, 1.442695
    %v936 = vpow.pop %v935
    %v937 = vadd.f32 %v936, 1.0
    %v938 = vrcp.pop %v937
    %v939 = vmul.f32 %v937, %v938
    %v940 = vsub.f32 1.0, %v939
    %v941 = vmul.f32 %v938, %v940
    %v942 = vadd.f32 %v938, %v941
    %vm943 = vweird.f32 %v937
    %vm944 = vweird.f32 %v938
    %vm945 = vmor %vm943, %vm944
    %v946 = vsel %vm945, %v938, %v942
    %v947 = vand.u32 2147483647, %v937
    %vm948 = vcmp.eq.f32.partialorder %v947, 8.507059e+37
    %v949 = vand.u32 %v937, 2147483648
    %v950 = vor.u32 1.1754944e-38, %v949
    %v951 = vsel %vm948, %v950, %v946
    %v952 = vmul.f32 1.0, %v951
    %v953 = vsub.f32 0.0, %v931
    %v954 = vmul.f32 %v953, 1.442695
    %v955 = vpow.pop %v954
    %v956 = vadd.f32 %v955, 1.0
    %v957 = vrcp.pop %v956
    %v958 = vmul.f32 %v956, %v957
    %v959 = vsub.f32 1.0, %v958
    %v960 = vmul.f32 %v957, %v959
    %v961 = vadd.f32 %v957, %v960
    %vm962 = vweird.f32 %v956
    %vm963 = vweird.f32 %v957
    %vm964 = vmor %vm962, %vm963
    %v965 = vsel %vm964, %v957, %v961
    %v966 = vand.u32 2147483647, %v956
    %vm967 = vcmp.eq.f32.partialorder %v966, 8.507059e+37
    %v968 = vand.u32 %v956, 2147483648
    %v969 = vor.u32 1.1754944e-38, %v968
    %v970 = vsel %vm967, %v969, %v965
    %v971 = vmul.f32 1.0, %v970
    %v972 = vsub.f32 0.0, %v932
    %v973 = vmul.f32 %v972, 1.442695
    %v974 = vpow.pop %v973
    %v975 = vadd.f32 %v974, 1.0
    %v976 = vrcp.pop %v975
    %v977 = vmul.f32 %v975, %v976
    %v978 = vsub.f32 1.0, %v977
    %v979 = vmul.f32 %v976, %v978
    %v980 = vadd.f32 %v976, %v979
    %vm981 = vweird.f32 %v975
    %vm982 = vweird.f32 %v976
    %vm983 = vmor %vm981, %vm982
    %v984 = vsel %vm983, %v976, %v980
    %v985 = vand.u32 2147483647, %v975
    %vm986 = vcmp.eq.f32.partialorder %v985, 8.507059e+37
    %v987 = vand.u32 %v975, 2147483648
    %v988 = vor.u32 1.1754944e-38, %v987
    %v989 = vsel %vm986, %v988, %v984
    %v990 = vmul.f32 1.0, %v989
    %v991 = vtanh.pop %v933
    %v992 = vmul.f32 %v952, %v840
    %v993 = vmul.f32 %v971, %v991
    %v994 = vadd.f32 %v992, %v993
    %v995 = vtanh.pop %v994
    %v996 = vmul.f32 %v990, %v995
    %s997 = scalar_lea.vmem [#allocation16], 16
    %998 = vst [vmem:[%s997] sm:$0xff] %v996
    %999 = vmatpush.msra.mxu0 %v610
    %1000 = vmatpush.msra.mxu0 %v606
    %1001 = vmatpush.msra.mxu0 %v602
    %1002 = vmatpush.msra.mxu0 %v598
    %1003 = vmatpush.msra.mxu0 %v594
    %1004 = vmatpush.msra.mxu0 %v590
    %1005 = vmatpush.msra.mxu0 %v586
    %1006 = vmatpush.msra.mxu0 %v582
    %1007 = vmatpush.msra.mxu0 %v578
    %1008 = vmatpush.msra.mxu0 %v574
    %1009 = vmatpush.msra.mxu0 %v570
    %1010 = vmatpush.msra.mxu0 %v566
    %1011 = vmatpush.msra.mxu0 %v562
    %1012 = vmatpush.msra.mxu0 %v558
    %1013 = vmatpush.msra.mxu0 %v554
    %1014 = vmatpush.msra.mxu0 %v550
    %1015 = vmatmul.f32.gmra.mxu0 %v996
    %v1016 = vpop.f32.mrf.mxu0
    %v1017 = vadd.f32 0.0, %v1016
    %1018 = vdwg.mxu0
    %1019 = vmatpush.msra.mxu0 %v611
    %1020 = vmatpush.msra.mxu0 %v607
    %1021 = vmatpush.msra.mxu0 %v603
    %1022 = vmatpush.msra.mxu0 %v599
    %1023 = vmatpush.msra.mxu0 %v595
    %1024 = vmatpush.msra.mxu0 %v591
    %1025 = vmatpush.msra.mxu0 %v587
    %1026 = vmatpush.msra.mxu0 %v583
    %1027 = vmatpush.msra.mxu0 %v579
    %1028 = vmatpush.msra.mxu0 %v575
    %1029 = vmatpush.msra.mxu0 %v571
    %1030 = vmatpush.msra.mxu0 %v567
    %1031 = vmatpush.msra.mxu0 %v563
    %1032 = vmatpush.msra.mxu0 %v559
    %1033 = vmatpush.msra.mxu0 %v555
    %1034 = vmatpush.msra.mxu0 %v551
    %1035 = vmatmul.f32.gmra.mxu0 %v996
    %v1036 = vpop.f32.mrf.mxu0
    %v1037 = vadd.f32 0.0, %v1036
    %1038 = vdwg.mxu0
    %1039 = vmatpush.msra.mxu0 %v612
    %1040 = vmatpush.msra.mxu0 %v608
    %1041 = vmatpush.msra.mxu0 %v604
    %1042 = vmatpush.msra.mxu0 %v600
    %1043 = vmatpush.msra.mxu0 %v596
    %1044 = vmatpush.msra.mxu0 %v592
    %1045 = vmatpush.msra.mxu0 %v588
    %1046 = vmatpush.msra.mxu0 %v584
    %1047 = vmatpush.msra.mxu0 %v580
    %1048 = vmatpush.msra.mxu0 %v576
    %1049 = vmatpush.msra.mxu0 %v572
    %1050 = vmatpush.msra.mxu0 %v568
    %1051 = vmatpush.msra.mxu0 %v564
    %1052 = vmatpush.msra.mxu0 %v560
    %1053 = vmatpush.msra.mxu0 %v556
    %1054 = vmatpush.msra.mxu0 %v552
    %1055 = vmatmul.f32.gmra.mxu0 %v996
    %v1056 = vpop.f32.mrf.mxu0
    %v1057 = vadd.f32 0.0, %v1056
    %1058 = vdwg.mxu0
    %1059 = vmatpush.msra.mxu0 %v613
    %1060 = vmatpush.msra.mxu0 %v609
    %1061 = vmatpush.msra.mxu0 %v605
    %1062 = vmatpush.msra.mxu0 %v601
    %1063 = vmatpush.msra.mxu0 %v597
    %1064 = vmatpush.msra.mxu0 %v593
    %1065 = vmatpush.msra.mxu0 %v589
    %1066 = vmatpush.msra.mxu0 %v585
    %1067 = vmatpush.msra.mxu0 %v581
    %1068 = vmatpush.msra.mxu0 %v577
    %1069 = vmatpush.msra.mxu0 %v573
    %1070 = vmatpush.msra.mxu0 %v569
    %1071 = vmatpush.msra.mxu0 %v565
    %1072 = vmatpush.msra.mxu0 %v561
    %1073 = vmatpush.msra.mxu0 %v557
    %1074 = vmatpush.msra.mxu0 %v553
    %1075 = vmatmul.f32.gmra.mxu0 %v996
    %v1076 = vpop.f32.mrf.mxu0
    %v1077 = vadd.f32 0.0, %v1076
    %1078 = vdwg.mxu0
    %s1079 = scalar_lea.vmem [#allocation4], 96
    %v1080 = vld [vmem:[%s1079] sm:$0xff]
    %v1081 = vld [vmem:[%s1079 + $0x8] sm:$0xff]
    %v1082 = vld [vmem:[%s1079 + $0x10] sm:$0xff]
    %v1083 = vld [vmem:[%s1079 + $0x18] sm:$0xff]
    %v1084 = vadd.f32 %v1080, %v1017
    %v1085 = vadd.f32 %v1081, %v1037
    %v1086 = vadd.f32 %v1082, %v1057
    %v1087 = vadd.f32 %v1083, %v1077
    %v1088 = vsub.f32 0.0, %v1084
    %v1089 = vmul.f32 %v1088, 1.442695
    %v1090 = vpow.pop %v1089
    %v1091 = vadd.f32 %v1090, 1.0
    %v1092 = vrcp.pop %v1091
    %v1093 = vmul.f32 %v1091, %v1092
    %v1094 = vsub.f32 1.0, %v1093
    %v1095 = vmul.f32 %v1092, %v1094
    %v1096 = vadd.f32 %v1092, %v1095
    %vm1097 = vweird.f32 %v1091
    %vm1098 = vweird.f32 %v1092
    %vm1099 = vmor %vm1097, %vm1098
    %v1100 = vsel %vm1099, %v1092, %v1096
    %v1101 = vand.u32 2147483647, %v1091
    %vm1102 = vcmp.eq.f32.partialorder %v1101, 8.507059e+37
    %v1103 = vand.u32 %v1091, 2147483648
    %v1104 = vor.u32 1.1754944e-38, %v1103
    %v1105 = vsel %vm1102, %v1104, %v1100
    %v1106 = vmul.f32 1.0, %v1105
    %v1107 = vsub.f32 0.0, %v1085
    %v1108 = vmul.f32 %v1107, 1.442695
    %v1109 = vpow.pop %v1108
    %v1110 = vadd.f32 %v1109, 1.0
    %v1111 = vrcp.pop %v1110
    %v1112 = vmul.f32 %v1110, %v1111
    %v1113 = vsub.f32 1.0, %v1112
    %v1114 = vmul.f32 %v1111, %v1113
    %v1115 = vadd.f32 %v1111, %v1114
    %vm1116 = vweird.f32 %v1110
    %vm1117 = vweird.f32 %v1111
    %vm1118 = vmor %vm1116, %vm1117
    %v1119 = vsel %vm1118, %v1111, %v1115
    %v1120 = vand.u32 2147483647, %v1110
    %vm1121 = vcmp.eq.f32.partialorder %v1120, 8.507059e+37
    %v1122 = vand.u32 %v1110, 2147483648
    %v1123 = vor.u32 1.1754944e-38, %v1122
    %v1124 = vsel %vm1121, %v1123, %v1119
    %v1125 = vmul.f32 1.0, %v1124
    %v1126 = vsub.f32 0.0, %v1086
    %v1127 = vmul.f32 %v1126, 1.442695
    %v1128 = vpow.pop %v1127
    %v1129 = vadd.f32 %v1128, 1.0
    %v1130 = vrcp.pop %v1129
    %v1131 = vmul.f32 %v1129, %v1130
    %v1132 = vsub.f32 1.0, %v1131
    %v1133 = vmul.f32 %v1130, %v1132
    %v1134 = vadd.f32 %v1130, %v1133
    %vm1135 = vweird.f32 %v1129
    %vm1136 = vweird.f32 %v1130
    %vm1137 = vmor %vm1135, %vm1136
    %v1138 = vsel %vm1137, %v1130, %v1134
    %v1139 = vand.u32 2147483647, %v1129
    %vm1140 = vcmp.eq.f32.partialorder %v1139, 8.507059e+37
    %v1141 = vand.u32 %v1129, 2147483648
    %v1142 = vor.u32 1.1754944e-38, %v1141
    %v1143 = vsel %vm1140, %v1142, %v1138
    %v1144 = vmul.f32 1.0, %v1143
    %v1145 = vtanh.pop %v1087
    %v1146 = vmul.f32 %v1106, %v994
    %v1147 = vmul.f32 %v1125, %v1145
    %v1148 = vadd.f32 %v1146, %v1147
    %v1149 = vtanh.pop %v1148
    %v1150 = vmul.f32 %v1144, %v1149
    %s1151 = scalar_lea.vmem [#allocation16], 24
    %1152 = vst [vmem:[%s1151] sm:$0xff] %v1150
    %1153 = vmatpush.msra.mxu0 %v610
    %1154 = vmatpush.msra.mxu0 %v606
    %1155 = vmatpush.msra.mxu0 %v602
    %1156 = vmatpush.msra.mxu0 %v598
    %1157 = vmatpush.msra.mxu0 %v594
    %1158 = vmatpush.msra.mxu0 %v590
    %1159 = vmatpush.msra.mxu0 %v586
    %1160 = vmatpush.msra.mxu0 %v582
    %1161 = vmatpush.msra.mxu0 %v578
    %1162 = vmatpush.msra.mxu0 %v574
    %1163 = vmatpush.msra.mxu0 %v570
    %1164 = vmatpush.msra.mxu0 %v566
    %1165 = vmatpush.msra.mxu0 %v562
    %1166 = vmatpush.msra.mxu0 %v558
    %1167 = vmatpush.msra.mxu0 %v554
    %1168 = vmatpush.msra.mxu0 %v550
    %1169 = vmatmul.f32.gmra.mxu0 %v1150
    %v1170 = vpop.f32.mrf.mxu0
    %v1171 = vadd.f32 0.0, %v1170
    %1172 = vdwg.mxu0
    %1173 = vmatpush.msra.mxu0 %v611
    %1174 = vmatpush.msra.mxu0 %v607
    %1175 = vmatpush.msra.mxu0 %v603
    %1176 = vmatpush.msra.mxu0 %v599
    %1177 = vmatpush.msra.mxu0 %v595
    %1178 = vmatpush.msra.mxu0 %v591
    %1179 = vmatpush.msra.mxu0 %v587
    %1180 = vmatpush.msra.mxu0 %v583
    %1181 = vmatpush.msra.mxu0 %v579
    %1182 = vmatpush.msra.mxu0 %v575
    %1183 = vmatpush.msra.mxu0 %v571
    %1184 = vmatpush.msra.mxu0 %v567
    %1185 = vmatpush.msra.mxu0 %v563
    %1186 = vmatpush.msra.mxu0 %v559
    %1187 = vmatpush.msra.mxu0 %v555
    %1188 = vmatpush.msra.mxu0 %v551
    %1189 = vmatmul.f32.gmra.mxu0 %v1150
    %v1190 = vpop.f32.mrf.mxu0
    %v1191 = vadd.f32 0.0, %v1190
    %1192 = vdwg.mxu0
    %1193 = vmatpush.msra.mxu0 %v612
    %1194 = vmatpush.msra.mxu0 %v608
    %1195 = vmatpush.msra.mxu0 %v604
    %1196 = vmatpush.msra.mxu0 %v600
    %1197 = vmatpush.msra.mxu0 %v596
    %1198 = vmatpush.msra.mxu0 %v592
    %1199 = vmatpush.msra.mxu0 %v588
    %1200 = vmatpush.msra.mxu0 %v584
    %1201 = vmatpush.msra.mxu0 %v580
    %1202 = vmatpush.msra.mxu0 %v576
    %1203 = vmatpush.msra.mxu0 %v572
    %1204 = vmatpush.msra.mxu0 %v568
    %1205 = vmatpush.msra.mxu0 %v564
    %1206 = vmatpush.msra.mxu0 %v560
    %1207 = vmatpush.msra.mxu0 %v556
    %1208 = vmatpush.msra.mxu0 %v552
    %1209 = vmatmul.f32.gmra.mxu0 %v1150
    %v1210 = vpop.f32.mrf.mxu0
    %v1211 = vadd.f32 0.0, %v1210
    %1212 = vdwg.mxu0
    %1213 = vmatpush.msra.mxu0 %v613
    %1214 = vmatpush.msra.mxu0 %v609
    %1215 = vmatpush.msra.mxu0 %v605
    %1216 = vmatpush.msra.mxu0 %v601
    %1217 = vmatpush.msra.mxu0 %v597
    %1218 = vmatpush.msra.mxu0 %v593
    %1219 = vmatpush.msra.mxu0 %v589
    %1220 = vmatpush.msra.mxu0 %v585
    %1221 = vmatpush.msra.mxu0 %v581
    %1222 = vmatpush.msra.mxu0 %v577
    %1223 = vmatpush.msra.mxu0 %v573
    %1224 = vmatpush.msra.mxu0 %v569
    %1225 = vmatpush.msra.mxu0 %v565
    %1226 = vmatpush.msra.mxu0 %v561
    %1227 = vmatpush.msra.mxu0 %v557
    %1228 = vmatpush.msra.mxu0 %v553
    %1229 = vmatmul.f32.gmra.mxu0 %v1150
    %v1230 = vpop.f32.mrf.mxu0
    %v1231 = vadd.f32 0.0, %v1230
    %1232 = vdwg.mxu0
    %s1233 = scalar_lea.vmem [#allocation4], 128
    %v1234 = vld [vmem:[%s1233] sm:$0xff]
    %v1235 = vld [vmem:[%s1233 + $0x8] sm:$0xff]
    %v1236 = vld [vmem:[%s1233 + $0x10] sm:$0xff]
    %v1237 = vld [vmem:[%s1233 + $0x18] sm:$0xff]
    %v1238 = vadd.f32 %v1234, %v1171
    %v1239 = vadd.f32 %v1235, %v1191
    %v1240 = vadd.f32 %v1236, %v1211
    %v1241 = vadd.f32 %v1237, %v1231
    %v1242 = vsub.f32 0.0, %v1238
    %v1243 = vmul.f32 %v1242, 1.442695
    %v1244 = vpow.pop %v1243
    %v1245 = vadd.f32 %v1244, 1.0
    %v1246 = vrcp.pop %v1245
    %v1247 = vmul.f32 %v1245, %v1246
    %v1248 = vsub.f32 1.0, %v1247
    %v1249 = vmul.f32 %v1246, %v1248
    %v1250 = vadd.f32 %v1246, %v1249
    %vm1251 = vweird.f32 %v1245
    %vm1252 = vweird.f32 %v1246
    %vm1253 = vmor %vm1251, %vm1252
    %v1254 = vsel %vm1253, %v1246, %v1250
    %v1255 = vand.u32 2147483647, %v1245
    %vm1256 = vcmp.eq.f32.partialorder %v1255, 8.507059e+37
    %v1257 = vand.u32 %v1245, 2147483648
    %v1258 = vor.u32 1.1754944e-38, %v1257
    %v1259 = vsel %vm1256, %v1258, %v1254
    %v1260 = vmul.f32 1.0, %v1259
    %v1261 = vsub.f32 0.0, %v1239
    %v1262 = vmul.f32 %v1261, 1.442695
    %v1263 = vpow.pop %v1262
    %v1264 = vadd.f32 %v1263, 1.0
    %v1265 = vrcp.pop %v1264
    %v1266 = vmul.f32 %v1264, %v1265
    %v1267 = vsub.f32 1.0, %v1266
    %v1268 = vmul.f32 %v1265, %v1267
    %v1269 = vadd.f32 %v1265, %v1268
    %vm1270 = vweird.f32 %v1264
    %vm1271 = vweird.f32 %v1265
    %vm1272 = vmor %vm1270, %vm1271
    %v1273 = vsel %vm1272, %v1265, %v1269
    %v1274 = vand.u32 2147483647, %v1264
    %vm1275 = vcmp.eq.f32.partialorder %v1274, 8.507059e+37
    %v1276 = vand.u32 %v1264, 2147483648
    %v1277 = vor.u32 1.1754944e-38, %v1276
    %v1278 = vsel %vm1275, %v1277, %v1273
    %v1279 = vmul.f32 1.0, %v1278
    %v1280 = vsub.f32 0.0, %v1240
    %v1281 = vmul.f32 %v1280, 1.442695
    %v1282 = vpow.pop %v1281
    %v1283 = vadd.f32 %v1282, 1.0
    %v1284 = vrcp.pop %v1283
    %v1285 = vmul.f32 %v1283, %v1284
    %v1286 = vsub.f32 1.0, %v1285
    %v1287 = vmul.f32 %v1284, %v1286
    %v1288 = vadd.f32 %v1284, %v1287
    %vm1289 = vweird.f32 %v1283
    %vm1290 = vweird.f32 %v1284
    %vm1291 = vmor %vm1289, %vm1290
    %v1292 = vsel %vm1291, %v1284, %v1288
    %v1293 = vand.u32 2147483647, %v1283
    %vm1294 = vcmp.eq.f32.partialorder %v1293, 8.507059e+37
    %v1295 = vand.u32 %v1283, 2147483648
    %v1296 = vor.u32 1.1754944e-38, %v1295
    %v1297 = vsel %vm1294, %v1296, %v1292
    %v1298 = vmul.f32 1.0, %v1297
    %v1299 = vtanh.pop %v1241
    %v1300 = vmul.f32 %v1260, %v1148
    %v1301 = vmul.f32 %v1279, %v1299
    %v1302 = vadd.f32 %v1300, %v1301
    %v1303 = vtanh.pop %v1302
    %v1304 = vmul.f32 %v1298, %v1303
    %s1305 = scalar_lea.vmem [#allocation16], 32
    %1306 = vst [vmem:[%s1305] sm:$0xff] %v1304
    %1307 = vmatpush.msra.mxu0 %v610
    %1308 = vmatpush.msra.mxu0 %v606
    %1309 = vmatpush.msra.mxu0 %v602
    %1310 = vmatpush.msra.mxu0 %v598
    %1311 = vmatpush.msra.mxu0 %v594
    %1312 = vmatpush.msra.mxu0 %v590
    %1313 = vmatpush.msra.mxu0 %v586
    %1314 = vmatpush.msra.mxu0 %v582
    %1315 = vmatpush.msra.mxu0 %v578
    %1316 = vmatpush.msra.mxu0 %v574
    %1317 = vmatpush.msra.mxu0 %v570
    %1318 = vmatpush.msra.mxu0 %v566
    %1319 = vmatpush.msra.mxu0 %v562
    %1320 = vmatpush.msra.mxu0 %v558
    %1321 = vmatpush.msra.mxu0 %v554
    %1322 = vmatpush.msra.mxu0 %v550
    %1323 = vmatmul.f32.gmra.mxu0 %v1304
    %v1324 = vpop.f32.mrf.mxu0
    %v1325 = vadd.f32 0.0, %v1324
    %1326 = vdwg.mxu0
    %1327 = vmatpush.msra.mxu0 %v611
    %1328 = vmatpush.msra.mxu0 %v607
    %1329 = vmatpush.msra.mxu0 %v603
    %1330 = vmatpush.msra.mxu0 %v599
    %1331 = vmatpush.msra.mxu0 %v595
    %1332 = vmatpush.msra.mxu0 %v591
    %1333 = vmatpush.msra.mxu0 %v587
    %1334 = vmatpush.msra.mxu0 %v583
    %1335 = vmatpush.msra.mxu0 %v579
    %1336 = vmatpush.msra.mxu0 %v575
    %1337 = vmatpush.msra.mxu0 %v571
    %1338 = vmatpush.msra.mxu0 %v567
    %1339 = vmatpush.msra.mxu0 %v563
    %1340 = vmatpush.msra.mxu0 %v559
    %1341 = vmatpush.msra.mxu0 %v555
    %1342 = vmatpush.msra.mxu0 %v551
    %1343 = vmatmul.f32.gmra.mxu0 %v1304
    %v1344 = vpop.f32.mrf.mxu0
    %v1345 = vadd.f32 0.0, %v1344
    %1346 = vdwg.mxu0
    %1347 = vmatpush.msra.mxu0 %v612
    %1348 = vmatpush.msra.mxu0 %v608
    %1349 = vmatpush.msra.mxu0 %v604
    %1350 = vmatpush.msra.mxu0 %v600
    %1351 = vmatpush.msra.mxu0 %v596
    %1352 = vmatpush.msra.mxu0 %v592
    %1353 = vmatpush.msra.mxu0 %v588
    %1354 = vmatpush.msra.mxu0 %v584
    %1355 = vmatpush.msra.mxu0 %v580
    %1356 = vmatpush.msra.mxu0 %v576
    %1357 = vmatpush.msra.mxu0 %v572
    %1358 = vmatpush.msra.mxu0 %v568
    %1359 = vmatpush.msra.mxu0 %v564
    %1360 = vmatpush.msra.mxu0 %v560
    %1361 = vmatpush.msra.mxu0 %v556
    %1362 = vmatpush.msra.mxu0 %v552
    %1363 = vmatmul.f32.gmra.mxu0 %v1304
    %v1364 = vpop.f32.mrf.mxu0
    %v1365 = vadd.f32 0.0, %v1364
    %1366 = vdwg.mxu0
    %1367 = vmatpush.msra.mxu0 %v613
    %1368 = vmatpush.msra.mxu0 %v609
    %1369 = vmatpush.msra.mxu0 %v605
    %1370 = vmatpush.msra.mxu0 %v601
    %1371 = vmatpush.msra.mxu0 %v597
    %1372 = vmatpush.msra.mxu0 %v593
    %1373 = vmatpush.msra.mxu0 %v589
    %1374 = vmatpush.msra.mxu0 %v585
    %1375 = vmatpush.msra.mxu0 %v581
    %1376 = vmatpush.msra.mxu0 %v577
    %1377 = vmatpush.msra.mxu0 %v573
    %1378 = vmatpush.msra.mxu0 %v569
    %1379 = vmatpush.msra.mxu0 %v565
    %1380 = vmatpush.msra.mxu0 %v561
    %1381 = vmatpush.msra.mxu0 %v557
    %1382 = vmatpush.msra.mxu0 %v553
    %1383 = vmatmul.f32.gmra.mxu0 %v1304
    %v1384 = vpop.f32.mrf.mxu0
    %v1385 = vadd.f32 0.0, %v1384
    %1386 = vdwg.mxu0
    %s1387 = scalar_lea.vmem [#allocation4], 160
    %v1388 = vld [vmem:[%s1387] sm:$0xff]
    %v1389 = vld [vmem:[%s1387 + $0x8] sm:$0xff]
    %v1390 = vld [vmem:[%s1387 + $0x10] sm:$0xff]
    %v1391 = vld [vmem:[%s1387 + $0x18] sm:$0xff]
    %v1392 = vadd.f32 %v1388, %v1325
    %v1393 = vadd.f32 %v1389, %v1345
    %v1394 = vadd.f32 %v1390, %v1365
    %v1395 = vadd.f32 %v1391, %v1385
    %v1396 = vsub.f32 0.0, %v1392
    %v1397 = vmul.f32 %v1396, 1.442695
    %v1398 = vpow.pop %v1397
    %v1399 = vadd.f32 %v1398, 1.0
    %v1400 = vrcp.pop %v1399
    %v1401 = vmul.f32 %v1399, %v1400
    %v1402 = vsub.f32 1.0, %v1401
    %v1403 = vmul.f32 %v1400, %v1402
    %v1404 = vadd.f32 %v1400, %v1403
    %vm1405 = vweird.f32 %v1399
    %vm1406 = vweird.f32 %v1400
    %vm1407 = vmor %vm1405, %vm1406
    %v1408 = vsel %vm1407, %v1400, %v1404
    %v1409 = vand.u32 2147483647, %v1399
    %vm1410 = vcmp.eq.f32.partialorder %v1409, 8.507059e+37
    %v1411 = vand.u32 %v1399, 2147483648
    %v1412 = vor.u32 1.1754944e-38, %v1411
    %v1413 = vsel %vm1410, %v1412, %v1408
    %v1414 = vmul.f32 1.0, %v1413
    %v1415 = vsub.f32 0.0, %v1393
    %v1416 = vmul.f32 %v1415, 1.442695
    %v1417 = vpow.pop %v1416
    %v1418 = vadd.f32 %v1417, 1.0
    %v1419 = vrcp.pop %v1418
    %v1420 = vmul.f32 %v1418, %v1419
    %v1421 = vsub.f32 1.0, %v1420
    %v1422 = vmul.f32 %v1419, %v1421
    %v1423 = vadd.f32 %v1419, %v1422
    %vm1424 = vweird.f32 %v1418
    %vm1425 = vweird.f32 %v1419
    %vm1426 = vmor %vm1424, %vm1425
    %v1427 = vsel %vm1426, %v1419, %v1423
    %v1428 = vand.u32 2147483647, %v1418
    %vm1429 = vcmp.eq.f32.partialorder %v1428, 8.507059e+37
    %v1430 = vand.u32 %v1418, 2147483648
    %v1431 = vor.u32 1.1754944e-38, %v1430
    %v1432 = vsel %vm1429, %v1431, %v1427
    %v1433 = vmul.f32 1.0, %v1432
    %v1434 = vsub.f32 0.0, %v1394
    %v1435 = vmul.f32 %v1434, 1.442695
    %v1436 = vpow.pop %v1435
    %v1437 = vadd.f32 %v1436, 1.0
    %v1438 = vrcp.pop %v1437
    %v1439 = vmul.f32 %v1437, %v1438
    %v1440 = vsub.f32 1.0, %v1439
    %v1441 = vmul.f32 %v1438, %v1440
    %v1442 = vadd.f32 %v1438, %v1441
    %vm1443 = vweird.f32 %v1437
    %vm1444 = vweird.f32 %v1438
    %vm1445 = vmor %vm1443, %vm1444
    %v1446 = vsel %vm1445, %v1438, %v1442
    %v1447 = vand.u32 2147483647, %v1437
    %vm1448 = vcmp.eq.f32.partialorder %v1447, 8.507059e+37
    %v1449 = vand.u32 %v1437, 2147483648
    %v1450 = vor.u32 1.1754944e-38, %v1449
    %v1451 = vsel %vm1448, %v1450, %v1446
    %v1452 = vmul.f32 1.0, %v1451
    %v1453 = vtanh.pop %v1395
    %v1454 = vmul.f32 %v1414, %v1302
    %v1455 = vmul.f32 %v1433, %v1453
    %v1456 = vadd.f32 %v1454, %v1455
    %v1457 = vtanh.pop %v1456
    %v1458 = vmul.f32 %v1452, %v1457
    %s1459 = scalar_lea.vmem [#allocation16], 40
    %1460 = vst [vmem:[%s1459] sm:$0xff] %v1458
    %1461 = vmatpush.msra.mxu0 %v610
    %1462 = vmatpush.msra.mxu0 %v606
    %1463 = vmatpush.msra.mxu0 %v602
    %1464 = vmatpush.msra.mxu0 %v598
    %1465 = vmatpush.msra.mxu0 %v594
    %1466 = vmatpush.msra.mxu0 %v590
    %1467 = vmatpush.msra.mxu0 %v586
    %1468 = vmatpush.msra.mxu0 %v582
    %1469 = vmatpush.msra.mxu0 %v578
    %1470 = vmatpush.msra.mxu0 %v574
    %1471 = vmatpush.msra.mxu0 %v570
    %1472 = vmatpush.msra.mxu0 %v566
    %1473 = vmatpush.msra.mxu0 %v562
    %1474 = vmatpush.msra.mxu0 %v558
    %1475 = vmatpush.msra.mxu0 %v554
    %1476 = vmatpush.msra.mxu0 %v550
    %1477 = vmatmul.f32.gmra.mxu0 %v1458
    %v1478 = vpop.f32.mrf.mxu0
    %v1479 = vadd.f32 0.0, %v1478
    %1480 = vdwg.mxu0
    %1481 = vmatpush.msra.mxu0 %v611
    %1482 = vmatpush.msra.mxu0 %v607
    %1483 = vmatpush.msra.mxu0 %v603
    %1484 = vmatpush.msra.mxu0 %v599
    %1485 = vmatpush.msra.mxu0 %v595
    %1486 = vmatpush.msra.mxu0 %v591
    %1487 = vmatpush.msra.mxu0 %v587
    %1488 = vmatpush.msra.mxu0 %v583
    %1489 = vmatpush.msra.mxu0 %v579
    %1490 = vmatpush.msra.mxu0 %v575
    %1491 = vmatpush.msra.mxu0 %v571
    %1492 = vmatpush.msra.mxu0 %v567
    %1493 = vmatpush.msra.mxu0 %v563
    %1494 = vmatpush.msra.mxu0 %v559
    %1495 = vmatpush.msra.mxu0 %v555
    %1496 = vmatpush.msra.mxu0 %v551
    %1497 = vmatmul.f32.gmra.mxu0 %v1458
    %v1498 = vpop.f32.mrf.mxu0
    %v1499 = vadd.f32 0.0, %v1498
    %1500 = vdwg.mxu0
    %1501 = vmatpush.msra.mxu0 %v612
    %1502 = vmatpush.msra.mxu0 %v608
    %1503 = vmatpush.msra.mxu0 %v604
    %1504 = vmatpush.msra.mxu0 %v600
    %1505 = vmatpush.msra.mxu0 %v596
    %1506 = vmatpush.msra.mxu0 %v592
    %1507 = vmatpush.msra.mxu0 %v588
    %1508 = vmatpush.msra.mxu0 %v584
    %1509 = vmatpush.msra.mxu0 %v580
    %1510 = vmatpush.msra.mxu0 %v576
    %1511 = vmatpush.msra.mxu0 %v572
    %1512 = vmatpush.msra.mxu0 %v568
    %1513 = vmatpush.msra.mxu0 %v564
    %1514 = vmatpush.msra.mxu0 %v560
    %1515 = vmatpush.msra.mxu0 %v556
    %1516 = vmatpush.msra.mxu0 %v552
    %1517 = vmatmul.f32.gmra.mxu0 %v1458
    %v1518 = vpop.f32.mrf.mxu0
    %v1519 = vadd.f32 0.0, %v1518
    %1520 = vdwg.mxu0
    %1521 = vmatpush.msra.mxu0 %v613
    %1522 = vmatpush.msra.mxu0 %v609
    %1523 = vmatpush.msra.mxu0 %v605
    %1524 = vmatpush.msra.mxu0 %v601
    %1525 = vmatpush.msra.mxu0 %v597
    %1526 = vmatpush.msra.mxu0 %v593
    %1527 = vmatpush.msra.mxu0 %v589
    %1528 = vmatpush.msra.mxu0 %v585
    %1529 = vmatpush.msra.mxu0 %v581
    %1530 = vmatpush.msra.mxu0 %v577
    %1531 = vmatpush.msra.mxu0 %v573
    %1532 = vmatpush.msra.mxu0 %v569
    %1533 = vmatpush.msra.mxu0 %v565
    %1534 = vmatpush.msra.mxu0 %v561
    %1535 = vmatpush.msra.mxu0 %v557
    %1536 = vmatpush.msra.mxu0 %v553
    %1537 = vmatmul.f32.gmra.mxu0 %v1458
    %v1538 = vpop.f32.mrf.mxu0
    %v1539 = vadd.f32 0.0, %v1538
    %1540 = vdwg.mxu0
    %s1541 = scalar_lea.vmem [#allocation4], 192
    %v1542 = vld [vmem:[%s1541] sm:$0xff]
    %v1543 = vld [vmem:[%s1541 + $0x8] sm:$0xff]
    %v1544 = vld [vmem:[%s1541 + $0x10] sm:$0xff]
    %v1545 = vld [vmem:[%s1541 + $0x18] sm:$0xff]
    %v1546 = vadd.f32 %v1542, %v1479
    %v1547 = vadd.f32 %v1543, %v1499
    %v1548 = vadd.f32 %v1544, %v1519
    %v1549 = vadd.f32 %v1545, %v1539
    %v1550 = vsub.f32 0.0, %v1546
    %v1551 = vmul.f32 %v1550, 1.442695
    %v1552 = vpow.pop %v1551
    %v1553 = vadd.f32 %v1552, 1.0
    %v1554 = vrcp.pop %v1553
    %v1555 = vmul.f32 %v1553, %v1554
    %v1556 = vsub.f32 1.0, %v1555
    %v1557 = vmul.f32 %v1554, %v1556
    %v1558 = vadd.f32 %v1554, %v1557
    %vm1559 = vweird.f32 %v1553
    %vm1560 = vweird.f32 %v1554
    %vm1561 = vmor %vm1559, %vm1560
    %v1562 = vsel %vm1561, %v1554, %v1558
    %v1563 = vand.u32 2147483647, %v1553
    %vm1564 = vcmp.eq.f32.partialorder %v1563, 8.507059e+37
    %v1565 = vand.u32 %v1553, 2147483648
    %v1566 = vor.u32 1.1754944e-38, %v1565
    %v1567 = vsel %vm1564, %v1566, %v1562
    %v1568 = vmul.f32 1.0, %v1567
    %v1569 = vsub.f32 0.0, %v1547
    %v1570 = vmul.f32 %v1569, 1.442695
    %v1571 = vpow.pop %v1570
    %v1572 = vadd.f32 %v1571, 1.0
    %v1573 = vrcp.pop %v1572
    %v1574 = vmul.f32 %v1572, %v1573
    %v1575 = vsub.f32 1.0, %v1574
    %v1576 = vmul.f32 %v1573, %v1575
    %v1577 = vadd.f32 %v1573, %v1576
    %vm1578 = vweird.f32 %v1572
    %vm1579 = vweird.f32 %v1573
    %vm1580 = vmor %vm1578, %vm1579
    %v1581 = vsel %vm1580, %v1573, %v1577
    %v1582 = vand.u32 2147483647, %v1572
    %vm1583 = vcmp.eq.f32.partialorder %v1582, 8.507059e+37
    %v1584 = vand.u32 %v1572, 2147483648
    %v1585 = vor.u32 1.1754944e-38, %v1584
    %v1586 = vsel %vm1583, %v1585, %v1581
    %v1587 = vmul.f32 1.0, %v1586
    %v1588 = vsub.f32 0.0, %v1548
    %v1589 = vmul.f32 %v1588, 1.442695
    %v1590 = vpow.pop %v1589
    %v1591 = vadd.f32 %v1590, 1.0
    %v1592 = vrcp.pop %v1591
    %v1593 = vmul.f32 %v1591, %v1592
    %v1594 = vsub.f32 1.0, %v1593
    %v1595 = vmul.f32 %v1592, %v1594
    %v1596 = vadd.f32 %v1592, %v1595
    %vm1597 = vweird.f32 %v1591
    %vm1598 = vweird.f32 %v1592
    %vm1599 = vmor %vm1597, %vm1598
    %v1600 = vsel %vm1599, %v1592, %v1596
    %v1601 = vand.u32 2147483647, %v1591
    %vm1602 = vcmp.eq.f32.partialorder %v1601, 8.507059e+37
    %v1603 = vand.u32 %v1591, 2147483648
    %v1604 = vor.u32 1.1754944e-38, %v1603
    %v1605 = vsel %vm1602, %v1604, %v1600
    %v1606 = vmul.f32 1.0, %v1605
    %v1607 = vtanh.pop %v1549
    %v1608 = vmul.f32 %v1568, %v1456
    %v1609 = vmul.f32 %v1587, %v1607
    %v1610 = vadd.f32 %v1608, %v1609
    %v1611 = vtanh.pop %v1610
    %v1612 = vmul.f32 %v1606, %v1611
    %s1613 = scalar_lea.vmem [#allocation16], 48
    %1614 = vst [vmem:[%s1613] sm:$0xff] %v1612
    %1615 = vmatpush.msra.mxu0 %v610
    %1616 = vmatpush.msra.mxu0 %v606
    %1617 = vmatpush.msra.mxu0 %v602
    %1618 = vmatpush.msra.mxu0 %v598
    %1619 = vmatpush.msra.mxu0 %v594
    %1620 = vmatpush.msra.mxu0 %v590
    %1621 = vmatpush.msra.mxu0 %v586
    %1622 = vmatpush.msra.mxu0 %v582
    %1623 = vmatpush.msra.mxu0 %v578
    %1624 = vmatpush.msra.mxu0 %v574
    %1625 = vmatpush.msra.mxu0 %v570
    %1626 = vmatpush.msra.mxu0 %v566
    %1627 = vmatpush.msra.mxu0 %v562
    %1628 = vmatpush.msra.mxu0 %v558
    %1629 = vmatpush.msra.mxu0 %v554
    %1630 = vmatpush.msra.mxu0 %v550
    %1631 = vmatmul.f32.gmra.mxu0 %v1612
    %v1632 = vpop.f32.mrf.mxu0
    %v1633 = vadd.f32 0.0, %v1632
    %1634 = vdwg.mxu0
    %1635 = vmatpush.msra.mxu0 %v611
    %1636 = vmatpush.msra.mxu0 %v607
    %1637 = vmatpush.msra.mxu0 %v603
    %1638 = vmatpush.msra.mxu0 %v599
    %1639 = vmatpush.msra.mxu0 %v595
    %1640 = vmatpush.msra.mxu0 %v591
    %1641 = vmatpush.msra.mxu0 %v587
    %1642 = vmatpush.msra.mxu0 %v583
    %1643 = vmatpush.msra.mxu0 %v579
    %1644 = vmatpush.msra.mxu0 %v575
    %1645 = vmatpush.msra.mxu0 %v571
    %1646 = vmatpush.msra.mxu0 %v567
    %1647 = vmatpush.msra.mxu0 %v563
    %1648 = vmatpush.msra.mxu0 %v559
    %1649 = vmatpush.msra.mxu0 %v555
    %1650 = vmatpush.msra.mxu0 %v551
    %1651 = vmatmul.f32.gmra.mxu0 %v1612
    %v1652 = vpop.f32.mrf.mxu0
    %v1653 = vadd.f32 0.0, %v1652
    %1654 = vdwg.mxu0
    %1655 = vmatpush.msra.mxu0 %v612
    %1656 = vmatpush.msra.mxu0 %v608
    %1657 = vmatpush.msra.mxu0 %v604
    %1658 = vmatpush.msra.mxu0 %v600
    %1659 = vmatpush.msra.mxu0 %v596
    %1660 = vmatpush.msra.mxu0 %v592
    %1661 = vmatpush.msra.mxu0 %v588
    %1662 = vmatpush.msra.mxu0 %v584
    %1663 = vmatpush.msra.mxu0 %v580
    %1664 = vmatpush.msra.mxu0 %v576
    %1665 = vmatpush.msra.mxu0 %v572
    %1666 = vmatpush.msra.mxu0 %v568
    %1667 = vmatpush.msra.mxu0 %v564
    %1668 = vmatpush.msra.mxu0 %v560
    %1669 = vmatpush.msra.mxu0 %v556
    %1670 = vmatpush.msra.mxu0 %v552
    %1671 = vmatmul.f32.gmra.mxu0 %v1612
    %v1672 = vpop.f32.mrf.mxu0
    %v1673 = vadd.f32 0.0, %v1672
    %1674 = vdwg.mxu0
    %1675 = vmatpush.msra.mxu0 %v613
    %1676 = vmatpush.msra.mxu0 %v609
    %1677 = vmatpush.msra.mxu0 %v605
    %1678 = vmatpush.msra.mxu0 %v601
    %1679 = vmatpush.msra.mxu0 %v597
    %1680 = vmatpush.msra.mxu0 %v593
    %1681 = vmatpush.msra.mxu0 %v589
    %1682 = vmatpush.msra.mxu0 %v585
    %1683 = vmatpush.msra.mxu0 %v581
    %1684 = vmatpush.msra.mxu0 %v577
    %1685 = vmatpush.msra.mxu0 %v573
    %1686 = vmatpush.msra.mxu0 %v569
    %1687 = vmatpush.msra.mxu0 %v565
    %1688 = vmatpush.msra.mxu0 %v561
    %1689 = vmatpush.msra.mxu0 %v557
    %1690 = vmatpush.msra.mxu0 %v553
    %1691 = vmatmul.f32.gmra.mxu0 %v1612
    %v1692 = vpop.f32.mrf.mxu0
    %v1693 = vadd.f32 0.0, %v1692
    %1694 = vdwg.mxu0
    %s1695 = scalar_lea.vmem [#allocation4], 224
    %v1696 = vld [vmem:[%s1695] sm:$0xff]
    %v1697 = vld [vmem:[%s1695 + $0x8] sm:$0xff]
    %v1698 = vld [vmem:[%s1695 + $0x10] sm:$0xff]
    %v1699 = vld [vmem:[%s1695 + $0x18] sm:$0xff]
    %v1700 = vadd.f32 %v1696, %v1633
    %v1701 = vadd.f32 %v1697, %v1653
    %v1702 = vadd.f32 %v1698, %v1673
    %v1703 = vadd.f32 %v1699, %v1693
    %v1704 = vsub.f32 0.0, %v1700
    %v1705 = vmul.f32 %v1704, 1.442695
    %v1706 = vpow.pop %v1705
    %v1707 = vadd.f32 %v1706, 1.0
    %v1708 = vrcp.pop %v1707
    %v1709 = vmul.f32 %v1707, %v1708
    %v1710 = vsub.f32 1.0, %v1709
    %v1711 = vmul.f32 %v1708, %v1710
    %v1712 = vadd.f32 %v1708, %v1711
    %vm1713 = vweird.f32 %v1707
    %vm1714 = vweird.f32 %v1708
    %vm1715 = vmor %vm1713, %vm1714
    %v1716 = vsel %vm1715, %v1708, %v1712
    %v1717 = vand.u32 2147483647, %v1707
    %vm1718 = vcmp.eq.f32.partialorder %v1717, 8.507059e+37
    %v1719 = vand.u32 %v1707, 2147483648
    %v1720 = vor.u32 1.1754944e-38, %v1719
    %v1721 = vsel %vm1718, %v1720, %v1716
    %v1722 = vmul.f32 1.0, %v1721
    %v1723 = vsub.f32 0.0, %v1701
    %v1724 = vmul.f32 %v1723, 1.442695
    %v1725 = vpow.pop %v1724
    %v1726 = vadd.f32 %v1725, 1.0
    %v1727 = vrcp.pop %v1726
    %v1728 = vmul.f32 %v1726, %v1727
    %v1729 = vsub.f32 1.0, %v1728
    %v1730 = vmul.f32 %v1727, %v1729
    %v1731 = vadd.f32 %v1727, %v1730
    %vm1732 = vweird.f32 %v1726
    %vm1733 = vweird.f32 %v1727
    %vm1734 = vmor %vm1732, %vm1733
    %v1735 = vsel %vm1734, %v1727, %v1731
    %v1736 = vand.u32 2147483647, %v1726
    %vm1737 = vcmp.eq.f32.partialorder %v1736, 8.507059e+37
    %v1738 = vand.u32 %v1726, 2147483648
    %v1739 = vor.u32 1.1754944e-38, %v1738
    %v1740 = vsel %vm1737, %v1739, %v1735
    %v1741 = vmul.f32 1.0, %v1740
    %v1742 = vsub.f32 0.0, %v1702
    %v1743 = vmul.f32 %v1742, 1.442695
    %v1744 = vpow.pop %v1743
    %v1745 = vadd.f32 %v1744, 1.0
    %v1746 = vrcp.pop %v1745
    %v1747 = vmul.f32 %v1745, %v1746
    %v1748 = vsub.f32 1.0, %v1747
    %v1749 = vmul.f32 %v1746, %v1748
    %v1750 = vadd.f32 %v1746, %v1749
    %vm1751 = vweird.f32 %v1745
    %vm1752 = vweird.f32 %v1746
    %vm1753 = vmor %vm1751, %vm1752
    %v1754 = vsel %vm1753, %v1746, %v1750
    %v1755 = vand.u32 2147483647, %v1745
    %vm1756 = vcmp.eq.f32.partialorder %v1755, 8.507059e+37
    %v1757 = vand.u32 %v1745, 2147483648
    %v1758 = vor.u32 1.1754944e-38, %v1757
    %v1759 = vsel %vm1756, %v1758, %v1754
    %v1760 = vmul.f32 1.0, %v1759
    %v1761 = vtanh.pop %v1703
    %v1762 = vmul.f32 %v1722, %v1610
    %v1763 = vmul.f32 %v1741, %v1761
    %v1764 = vadd.f32 %v1762, %v1763
    %v1765 = vtanh.pop %v1764
    %v1766 = vmul.f32 %v1760, %v1765
    %s1767 = scalar_lea.vmem [#allocation16], 56
    %1768 = vst [vmem:[%s1767] sm:$0xff] %v1766
    %1769 = vmatpush.msra.mxu0 %v610
    %1770 = vmatpush.msra.mxu0 %v606
    %1771 = vmatpush.msra.mxu0 %v602
    %1772 = vmatpush.msra.mxu0 %v598
    %1773 = vmatpush.msra.mxu0 %v594
    %1774 = vmatpush.msra.mxu0 %v590
    %1775 = vmatpush.msra.mxu0 %v586
    %1776 = vmatpush.msra.mxu0 %v582
    %1777 = vmatpush.msra.mxu0 %v578
    %1778 = vmatpush.msra.mxu0 %v574
    %1779 = vmatpush.msra.mxu0 %v570
    %1780 = vmatpush.msra.mxu0 %v566
    %1781 = vmatpush.msra.mxu0 %v562
    %1782 = vmatpush.msra.mxu0 %v558
    %1783 = vmatpush.msra.mxu0 %v554
    %1784 = vmatpush.msra.mxu0 %v550
    %1785 = vmatmul.f32.gmra.mxu0 %v1766
    %v1786 = vpop.f32.mrf.mxu0
    %v1787 = vadd.f32 0.0, %v1786
    %1788 = vdwg.mxu0
    %1789 = vmatpush.msra.mxu0 %v611
    %1790 = vmatpush.msra.mxu0 %v607
    %1791 = vmatpush.msra.mxu0 %v603
    %1792 = vmatpush.msra.mxu0 %v599
    %1793 = vmatpush.msra.mxu0 %v595
    %1794 = vmatpush.msra.mxu0 %v591
    %1795 = vmatpush.msra.mxu0 %v587
    %1796 = vmatpush.msra.mxu0 %v583
    %1797 = vmatpush.msra.mxu0 %v579
    %1798 = vmatpush.msra.mxu0 %v575
    %1799 = vmatpush.msra.mxu0 %v571
    %1800 = vmatpush.msra.mxu0 %v567
    %1801 = vmatpush.msra.mxu0 %v563
    %1802 = vmatpush.msra.mxu0 %v559
    %1803 = vmatpush.msra.mxu0 %v555
    %1804 = vmatpush.msra.mxu0 %v551
    %1805 = vmatmul.f32.gmra.mxu0 %v1766
    %v1806 = vpop.f32.mrf.mxu0
    %v1807 = vadd.f32 0.0, %v1806
    %1808 = vdwg.mxu0
    %1809 = vmatpush.msra.mxu0 %v612
    %1810 = vmatpush.msra.mxu0 %v608
    %1811 = vmatpush.msra.mxu0 %v604
    %1812 = vmatpush.msra.mxu0 %v600
    %1813 = vmatpush.msra.mxu0 %v596
    %1814 = vmatpush.msra.mxu0 %v592
    %1815 = vmatpush.msra.mxu0 %v588
    %1816 = vmatpush.msra.mxu0 %v584
    %1817 = vmatpush.msra.mxu0 %v580
    %1818 = vmatpush.msra.mxu0 %v576
    %1819 = vmatpush.msra.mxu0 %v572
    %1820 = vmatpush.msra.mxu0 %v568
    %1821 = vmatpush.msra.mxu0 %v564
    %1822 = vmatpush.msra.mxu0 %v560
    %1823 = vmatpush.msra.mxu0 %v556
    %1824 = vmatpush.msra.mxu0 %v552
    %1825 = vmatmul.f32.gmra.mxu0 %v1766
    %v1826 = vpop.f32.mrf.mxu0
    %v1827 = vadd.f32 0.0, %v1826
    %1828 = vdwg.mxu0
    %1829 = vmatpush.msra.mxu0 %v613
    %1830 = vmatpush.msra.mxu0 %v609
    %1831 = vmatpush.msra.mxu0 %v605
    %1832 = vmatpush.msra.mxu0 %v601
    %1833 = vmatpush.msra.mxu0 %v597
    %1834 = vmatpush.msra.mxu0 %v593
    %1835 = vmatpush.msra.mxu0 %v589
    %1836 = vmatpush.msra.mxu0 %v585
    %1837 = vmatpush.msra.mxu0 %v581
    %1838 = vmatpush.msra.mxu0 %v577
    %1839 = vmatpush.msra.mxu0 %v573
    %1840 = vmatpush.msra.mxu0 %v569
    %1841 = vmatpush.msra.mxu0 %v565
    %1842 = vmatpush.msra.mxu0 %v561
    %1843 = vmatpush.msra.mxu0 %v557
    %1844 = vmatpush.msra.mxu0 %v553
    %1845 = vmatmul.f32.gmra.mxu0 %v1766
    %v1846 = vpop.f32.mrf.mxu0
    %v1847 = vadd.f32 0.0, %v1846
    %1848 = vdwg.mxu0
    %1849 = vst [vmem:[#allocation2] sm:$0xff] %v1787
    %1850 = vst [vmem:[#allocation2 + $0x8] sm:$0xff] %v1807
    %1851 = vst [vmem:[#allocation2 + $0x10] sm:$0xff] %v1827
    %1852 = vst [vmem:[#allocation2 + $0x18] sm:$0xff] %v1847
    %1853 = vst [vmem:[#allocation3] sm:$0xff] %v1764
    %1854 = vst [vmem:[#allocation17] sm:$0xff] %v1764
    // Predicated region
    $region54: #{tpu_custom_call.1} parent=1 // pred_check
      _
    $region55: #{tpu_custom_call.1} parent=1 // pred_check_branch
      %1856 = sbr.rel (0) target = $region57
    $region56: #{tpu_custom_call.1} parent=1 // pred_region
      %1858 = vsyncadd [#allocation7], 0
      %s1859 = sshll.u32 [#allocation16], 4
      %s1860 = int_to_ptr.vmem [resolvable:$true] %s1859
      %s1861 = sshll.u32 %s6, 4
      %s1862 = int_to_ptr.hbm [resolvable:$true] %s1861
      %1867 = dma.vmem_to_hbm [thread:$0]  %s1860, 1024, %s1862, [#allocation7], 128, 128, 8
    $region57: #{tpu_custom_call.1} parent=1 // pred_fallthru
      _
    // Predicated region
    $region58: #{tpu_custom_call.1} parent=1 // pred_check
      _
    $region59: #{tpu_custom_call.1} parent=1 // pred_check_branch
      %1869 = sbr.rel (0) target = $region61
    $region60: #{tpu_custom_call.1} parent=1 // pred_region
      %1871 = vsyncadd [#allocation18], 0
      %s1873 = sshll.u32 [#allocation17], 4
      %s1874 = int_to_ptr.vmem [resolvable:$true] %s1873
      %s1875 = sshll.u32 %s7, 4
      %s1876 = int_to_ptr.hbm [resolvable:$true] %s1875
      %1878 = dma.vmem_to_hbm [thread:$0]  %s1874, 128, %s1876, [#allocation18]
    $region61: #{tpu_custom_call.1} parent=1 // pred_fallthru
      _
    // Predicated region
    $region62: #{tpu_custom_call.1} parent=1 // pred_check
      _
    $region63: #{tpu_custom_call.1} parent=1 // pred_check_branch
      %1880 = sbr.rel (0) target = $region65
    $region64: #{tpu_custom_call.1} parent=1 // pred_region
      %1882 = dma.done [#allocation7], 1024
    $region65: #{tpu_custom_call.1} parent=1 // pred_fallthru
      _
    // Predicated region
    $region66: #{tpu_custom_call.1} parent=1 // pred_check
      _
    $region67: #{tpu_custom_call.1} parent=1 // pred_check_branch
      %1884 = sbr.rel (0) target = $region69
    $region68: #{tpu_custom_call.1} parent=1 // pred_region
      %1886 = dma.done [#allocation18], 128
    $region69: #{tpu_custom_call.1} parent=1 // pred_fallthru
      _
    %1887 = vsyncpa [#allocation6], 1
    %1888 = vsyncpa [#allocation9], 1
    %1889 = vsyncpa [#allocation12], 1
    %1890 = vsyncpa [#allocation15], 1
    %1891 = vsyncpa [#allocation7], 1
    %1892 = vsyncpa [#allocation18], 1

</llo_original>
